<compile_context>
chip_gen: v7x
topology: tpu7x:2x2x1
jax: 0.10.0
libtpu: 0.0.40
codegen_flags: <defaults>
</compile_context>

<pallas_src>
import jax
import jax.numpy as jnp
from jax.experimental import pallas as pl
from jax.experimental.pallas import tpu as pltpu

D_IN = 784      # flattened 28x28 image
D_LAT = 20      # latent dim
S_SAMPLES = 10  # number of eps samples in forward()


def _softplus(x):
    # Matches torch.nn.Softplus(beta=1, threshold=20):
    # returns x when x > 20, else log(1 + exp(x)) (computed overflow-safely).
    return jnp.where(x > 20.0, x, jnp.log1p(jnp.exp(jnp.minimum(x, 20.0))))


def vae_kernel(x_ref, w01_ref, b01_ref, wd_ref, bd_ref, eps_ref,
               out_ref, mustd_ref):
    x = x_ref[...]                                                    # [B, 784]
    b = x.shape[0]

    # ---- fused encoder: one [784,40] matmul, softplus, split mu/std ----
    y = _softplus(
        jnp.dot(x, w01_ref[...], preferred_element_type=jnp.float32)
        + b01_ref[...]
    )                                                                 # [B, 40]
    mustd_ref[...] = y                                                # packed mu||std
    mu = y[:, :D_LAT]                                                 # [B, 20]
    std = y[:, D_LAT:2 * D_LAT]                                       # [B, 20]

    # ---- reparameterize all S samples at once ----
    eps = eps_ref[...]                                                # [S, 1, 20]
    z = mu[None, :, :] + eps * std[None, :, :]                        # [S, B, 20]
    z_flat = z.reshape(S_SAMPLES * b, D_LAT)                          # [S*B, 20]

    # ---- single batched decoder matmul + sigmoid + mean over samples ----
    logits = (
        jnp.dot(z_flat, wd_ref[...], preferred_element_type=jnp.float32)
        + bd_ref[...]
    )                                                                 # [S*B, 784]
    dec = jax.nn.sigmoid(logits).reshape(S_SAMPLES, b, D_IN)          # [S, B, 784]
    out_ref[...] = jnp.sum(dec, axis=0) * (1.0 / S_SAMPLES)           # [B, 784]


def vae_forward(x, w0, b0, w1, b1, wd, bd, eps):
    """Returns (decoded_mean [B,784], mu [B,20], std [B,20])."""
    B = x.shape[0]
    # Fuse the two encoder linears wrapper-side: x @ [w0|w1] + [b0|b1].
    w01 = jnp.concatenate([w0, w1], axis=1)                           # [784, 40]
    b01 = jnp.concatenate([b0, b1], axis=1)                           # [1, 40]

    vmem = pl.BlockSpec(memory_space=pltpu.MemorySpace.VMEM)
    out_shapes = (
        jax.ShapeDtypeStruct((B, D_IN), jnp.float32),                 # decoded mean
        jax.ShapeDtypeStruct((B, 2 * D_LAT), jnp.float32),            # packed mu||std
    )
    out, mustd = pl.pallas_call(
        vae_kernel,
        out_shape=out_shapes,
        in_specs=[vmem] * 6,
        out_specs=(vmem, vmem),
    )(x, w01, b01, wd, bd, eps)
    return out, mustd[:, :D_LAT], mustd[:, D_LAT:]


def init_params(key):
    """Deterministic init matching nn.Linear's U(-1/sqrt(fan_in), 1/sqrt(fan_in))."""
    ks = jax.random.split(key, 6)

    def lin(kw, kb, fan_in, fan_out):
        bound = 1.0 / float(fan_in) ** 0.5
        w = jax.random.uniform(kw, (fan_in, fan_out), jnp.float32, -bound, bound)
        b = jax.random.uniform(kb, (1, fan_out), jnp.float32, -bound, bound)
        return w, b

    w0, b0 = lin(ks[0], ks[1], D_IN, D_LAT)   # self.l0 : 784 -> 20
    w1, b1 = lin(ks[2], ks[3], D_IN, D_LAT)   # self.l1 : 784 -> 20
    wd, bd = lin(ks[4], ks[5], D_LAT, D_IN)   # self.l  : 20 -> 784
    return w0, b0, w1, b1, wd, bd


def _reference(x, w0, b0, w1, b1, wd, bd, eps):
    mu = jax.nn.softplus(x @ w0 + b0)
    std = jax.nn.softplus(x @ w1 + b1)
    z = mu[None] + eps * std[None]                     # [S, B, 20]
    dec = jax.nn.sigmoid(jnp.einsum("sbl,lo->sbo", z, wd) + bd)
    return dec.mean(axis=0), mu, std


if __name__ == "__main__":
    key = jax.random.PRNGKey(0)
    kx, kp, ke = jax.random.split(key, 3)

    B = 8
    x = jax.random.uniform(kx, (B, D_IN), jnp.float32)
    params = init_params(kp)
    # torch.rand([10, 20]).unsqueeze(1) -> uniform [0,1), shape [10, 1, 20]
    # TODO(synk): torch generates eps inside forward(); here it is a deterministic input.
    eps = jax.random.uniform(ke, (S_SAMPLES, 1, D_LAT), jnp.float32)

    out, mu, std = vae_forward(x, *params, eps)
    jax.block_until_ready((out, mu, std))

    ref_out, ref_mu, ref_std = _reference(x, *params, eps)
    assert out.shape == (B, D_IN) and mu.shape == (B, D_LAT) and std.shape == (B, D_LAT)
    assert jnp.allclose(out, ref_out, atol=1e-5, rtol=1e-5)
    assert jnp.allclose(mu, ref_mu, atol=1e-5, rtol=1e-5)
    assert jnp.allclose(std, ref_std, atol=1e-5, rtol=1e-5)

    print("KERNEL_OK")
</pallas_src>

<mosaic_0001>
module attributes {stable_mosaic.version = 11 : i64} {
  func.func @vae_kernel(%arg0: memref<8x784xf32, #tpu.memory_space<vmem>>, %arg1: memref<784x40xf32, #tpu.memory_space<vmem>>, %arg2: memref<1x40xf32, #tpu.memory_space<vmem>>, %arg3: memref<20x784xf32, #tpu.memory_space<vmem>>, %arg4: memref<1x784xf32, #tpu.memory_space<vmem>>, %arg5: memref<10x1x20xf32, #tpu.memory_space<vmem>>, %arg6: memref<8x784xf32, #tpu.memory_space<vmem>>, %arg7: memref<8x40xf32, #tpu.memory_space<vmem>>) attributes {dimension_semantics = [], scalar_prefetch = 0 : i64, scratch_operands = 0 : i64, tpu.core_type = #tpu.core_type<tc>} {
    %c0 = arith.constant 0 : index
    %c0_0 = arith.constant 0 : index
    %0 = vector.load %arg0[%c0, %c0_0] : memref<8x784xf32, #tpu.memory_space<vmem>>, vector<8x784xf32>
    %c0_1 = arith.constant 0 : index
    %c0_2 = arith.constant 0 : index
    %1 = vector.load %arg1[%c0_1, %c0_2] : memref<784x40xf32, #tpu.memory_space<vmem>>, vector<784x40xf32>
    %cst = arith.constant dense<0.000000e+00> : vector<8x40xf32>
    %2 = tpu.matmul %0, %1, %cst {dimension_numbers = #tpu.dot_dimension_numbers<[1], [0], [0], [1], [0, 0, 1, 1], [], []>} : vector<8x784xf32>, vector<784x40xf32>, vector<8x40xf32> -> vector<8x40xf32>
    %c0_3 = arith.constant 0 : index
    %c0_4 = arith.constant 0 : index
    %3 = vector.load %arg2[%c0_3, %c0_4] : memref<1x40xf32, #tpu.memory_space<vmem>>, vector<1x40xf32>
    %4 = vector.broadcast %3 : vector<1x40xf32> to vector<8x40xf32>
    %5 = arith.addf %2, %4 : vector<8x40xf32>
    %cst_5 = arith.constant 2.000000e+01 : f32
    %6 = vector.broadcast %cst_5 : f32 to vector<8x40xf32>
    %7 = arith.cmpf ogt, %5, %6 : vector<8x40xf32>
    %cst_6 = arith.constant 2.000000e+01 : f32
    %8 = vector.broadcast %cst_6 : f32 to vector<8x40xf32>
    %9 = arith.minimumf %5, %8 : vector<8x40xf32>
    %10 = math.exp %9 : vector<8x40xf32>
    %11 = math.log1p %10 : vector<8x40xf32>
    %12 = arith.select %7, %5, %11 : vector<8x40xi1>, vector<8x40xf32>
    %c0_7 = arith.constant 0 : index
    %c0_8 = arith.constant 0 : index
    %13 = vector.load %arg7[%c0_7, %c0_8] : memref<8x40xf32, #tpu.memory_space<vmem>>, vector<8x40xf32>
    tpu.vector_store %arg7[%c0_7, %c0_8], %12 {strides = array<i32>} : memref<8x40xf32, #tpu.memory_space<vmem>>, vector<8x40xf32>,
    %14 = vector.extract_strided_slice %12 {offsets = [0, 0], sizes = [8, 20], strides = [1, 1]} : vector<8x40xf32> to vector<8x20xf32>
    %15 = vector.extract_strided_slice %12 {offsets = [0, 20], sizes = [8, 20], strides = [1, 1]} : vector<8x40xf32> to vector<8x20xf32>
    %c0_9 = arith.constant 0 : index
    %c0_10 = arith.constant 0 : index
    %c0_11 = arith.constant 0 : index
    %16 = vector.load %arg5[%c0_9, %c0_10, %c0_11] : memref<10x1x20xf32, #tpu.memory_space<vmem>>, vector<10x1x20xf32>
    %17 = vector.shape_cast %14 : vector<8x20xf32> to vector<1x8x20xf32>
    %18 = vector.shape_cast %15 : vector<8x20xf32> to vector<1x8x20xf32>
    %19 = vector.broadcast %16 : vector<10x1x20xf32> to vector<10x8x20xf32>
    %20 = vector.broadcast %18 : vector<1x8x20xf32> to vector<10x8x20xf32>
    %21 = arith.mulf %19, %20 : vector<10x8x20xf32>
    %22 = vector.broadcast %17 : vector<1x8x20xf32> to vector<10x8x20xf32>
    %23 = arith.addf %22, %21 : vector<10x8x20xf32>
    %24 = vector.shape_cast %23 : vector<10x8x20xf32> to vector<80x20xf32>
    %c0_12 = arith.constant 0 : index
    %c0_13 = arith.constant 0 : index
    %25 = vector.load %arg3[%c0_12, %c0_13] : memref<20x784xf32, #tpu.memory_space<vmem>>, vector<20x784xf32>
    %cst_14 = arith.constant dense<0.000000e+00> : vector<80x784xf32>
    %26 = tpu.matmul %24, %25, %cst_14 {dimension_numbers = #tpu.dot_dimension_numbers<[1], [0], [0], [1], [0, 0, 1, 1], [], []>} : vector<80x20xf32>, vector<20x784xf32>, vector<80x784xf32> -> vector<80x784xf32>
    %c0_15 = arith.constant 0 : index
    %c0_16 = arith.constant 0 : index
    %27 = vector.load %arg4[%c0_15, %c0_16] : memref<1x784xf32, #tpu.memory_space<vmem>>, vector<1x784xf32>
    %28 = vector.broadcast %27 : vector<1x784xf32> to vector<80x784xf32>
    %29 = arith.addf %26, %28 : vector<80x784xf32>
    %30 = arith.negf %29 : vector<80x784xf32>
    %31 = math.exp %30 : vector<80x784xf32>
    %cst_17 = arith.constant 1.000000e+00 : f32
    %32 = vector.broadcast %cst_17 : f32 to vector<80x784xf32>
    %33 = arith.addf %32, %31 : vector<80x784xf32>
    %34 = arith.divf %32, %33 : vector<80x784xf32>
    %35 = vector.shape_cast %34 : vector<80x784xf32> to vector<10x8x784xf32>
    %cst_18 = arith.constant dense<0.000000e+00> : vector<8x784xf32>
    %36 = vector.multi_reduction <add>, %35, %cst_18 [0] : vector<10x8x784xf32> to vector<8x784xf32>
    %cst_19 = arith.constant 1.000000e-01 : f32
    %37 = vector.broadcast %cst_19 : f32 to vector<8x784xf32>
    %38 = arith.mulf %36, %37 : vector<8x784xf32>
    %c0_20 = arith.constant 0 : index
    %c0_21 = arith.constant 0 : index
    %39 = vector.load %arg6[%c0_20, %c0_21] : memref<8x784xf32, #tpu.memory_space<vmem>>, vector<8x784xf32>
    tpu.vector_store %arg6[%c0_20, %c0_21], %38 {strides = array<i32>} : memref<8x784xf32, #tpu.memory_space<vmem>>, vector<8x784xf32>,
    return
  }
}

</mosaic_0001>

<llo_original>
// kernel: tpu_custom_call.1
$region0: #{tpu_custom_call.1}
  #allocation0 [shape = 'u32[]', space=smem, size = 0x4, offset = 0x4, fixed_abs, tag = 'smem constant byte address 0x4 - core index']
  #allocation1 [shape = 'u32[144,128]{1,0:T(1,128)}', space=vmem, size = 0x12000, scoped, tag = 'internal scratch']
  %s0 = inlined_call_operand.vmem [shape: f32[8,784], index: 0, kind: input, shape index: {}]
  %s1 = inlined_call_operand.vmem [shape: f32[784,40], index: 1, kind: input, shape index: {}]
  %s2 = inlined_call_operand.vmem [shape: f32[1,40], index: 2, kind: input, shape index: {}]
  %s3 = inlined_call_operand.vmem [shape: f32[20,784], index: 3, kind: input, shape index: {}]
  %s4 = inlined_call_operand.vmem [shape: f32[1,784], index: 4, kind: input, shape index: {}]
  %s5 = inlined_call_operand.vmem [shape: f32[10,1,20], index: 5, kind: input, shape index: {}]
  %s6 = inlined_call_operand.hbm [shape: f32[8,784], index: 6, kind: output, shape index: {0}]
  %s7 = inlined_call_operand.hbm [shape: f32[8,40], index: 7, kind: output, shape index: {1}]
  %8 = xla_tuple %s6, %s7
  %s9 = sld [smem:[#allocation0]]
  $region42: #{tpu_custom_call.1} parent=0
    _
  %s11 = ssub.s32 1, %s9
  %s12 = scalar_select 0, %s11, %s9
  $region1: #{tpu_custom_call.1} parent=0
    #allocation2 [shape = 'u8[28672]{0}', space=vmem, size = 0x7000, scoped, tag = 'output window, operand 0, single buffered']
    #allocation3 [shape = 's32[1]{0}', space=sflag, size = 0x4, scoped, tag = 'scoped memory for tpu_custom_call.1']
    #allocation4 [shape = 'u8[4096]{0}', space=vmem, size = 0x1000, scoped, tag = 'output window, operand 1, single buffered']
    #allocation5 [shape = 's32[1]{0}', space=sflag, size = 0x4, scoped, tag = 'scoped memory for tpu_custom_call.1']
    %13 = vsyncpa [#allocation3], 0
    %14 = vsyncpa [#allocation5], 0
    // Predicated region
    $region2: #{tpu_custom_call.1} parent=1 // pred_check
      _
    $region3: #{tpu_custom_call.1} parent=1 // pred_check_branch
      %16 = sbr.rel (0) target = $region5
    $region4: #{tpu_custom_call.1} parent=1 // pred_region
      _
    $region5: #{tpu_custom_call.1} parent=1 // pred_fallthru
      _
    // Predicated region
    $region6: #{tpu_custom_call.1} parent=1 // pred_check
      _
    $region7: #{tpu_custom_call.1} parent=1 // pred_check_branch
      %18 = sbr.rel (0) target = $region9
    $region8: #{tpu_custom_call.1} parent=1 // pred_region
      _
    $region9: #{tpu_custom_call.1} parent=1 // pred_fallthru
      _
    // Predicated region
    $region10: #{tpu_custom_call.1} parent=1 // pred_check
      _
    $region11: #{tpu_custom_call.1} parent=1 // pred_check_branch
      %20 = sbr.rel (0) target = $region13
    $region12: #{tpu_custom_call.1} parent=1 // pred_region
      _
    $region13: #{tpu_custom_call.1} parent=1 // pred_fallthru
      _
    // Predicated region
    $region14: #{tpu_custom_call.1} parent=1 // pred_check
      _
    $region15: #{tpu_custom_call.1} parent=1 // pred_check_branch
      %22 = sbr.rel (0) target = $region17
    $region16: #{tpu_custom_call.1} parent=1 // pred_region
      _
    $region17: #{tpu_custom_call.1} parent=1 // pred_fallthru
      _
    // Predicated region
    $region18: #{tpu_custom_call.1} parent=1 // pred_check
      _
    $region19: #{tpu_custom_call.1} parent=1 // pred_check_branch
      %24 = sbr.rel (0) target = $region21
    $region20: #{tpu_custom_call.1} parent=1 // pred_region
      _
    $region21: #{tpu_custom_call.1} parent=1 // pred_fallthru
      _
    // Predicated region
    $region22: #{tpu_custom_call.1} parent=1 // pred_check
      _
    $region23: #{tpu_custom_call.1} parent=1 // pred_check_branch
      %26 = sbr.rel (0) target = $region25
    $region24: #{tpu_custom_call.1} parent=1 // pred_region
      _
    $region25: #{tpu_custom_call.1} parent=1 // pred_fallthru
      _
    %v27 = vld [vmem:[%s0] sm:$0xff]
    %v28 = vld [vmem:[%s0 + $0x8] sm:$0xff]
    %v29 = vld [vmem:[%s0 + $0x10] sm:$0xff]
    %v30 = vld [vmem:[%s0 + $0x18] sm:$0xff]
    %v31 = vld [vmem:[%s0 + $0x20] sm:$0xff]
    %v32 = vld [vmem:[%s0 + $0x28] sm:$0xff]
    %v33 = vld [vmem:[%s0 + $0x30] sm:$0xff]
    %v34 = vld [vmem:[%s1] sm:$0xff]
    %v35 = vld [vmem:[%s1 + $0x8] sm:$0xff]
    %v36 = vld [vmem:[%s1 + $0x10] sm:$0xff]
    %v37 = vld [vmem:[%s1 + $0x18] sm:$0xff]
    %v38 = vld [vmem:[%s1 + $0x20] sm:$0xff]
    %v39 = vld [vmem:[%s1 + $0x28] sm:$0xff]
    %v40 = vld [vmem:[%s1 + $0x30] sm:$0xff]
    %v41 = vld [vmem:[%s1 + $0x38] sm:$0xff]
    %v42 = vld [vmem:[%s1 + $0x40] sm:$0xff]
    %v43 = vld [vmem:[%s1 + $0x48] sm:$0xff]
    %v44 = vld [vmem:[%s1 + $0x50] sm:$0xff]
    %v45 = vld [vmem:[%s1 + $0x58] sm:$0xff]
    %v46 = vld [vmem:[%s1 + $0x60] sm:$0xff]
    %v47 = vld [vmem:[%s1 + $0x68] sm:$0xff]
    %v48 = vld [vmem:[%s1 + $0x70] sm:$0xff]
    %v49 = vld [vmem:[%s1 + $0x78] sm:$0xff]
    %v50 = vld [vmem:[%s1 + $0x80] sm:$0xff]
    %v51 = vld [vmem:[%s1 + $0x88] sm:$0xff]
    %v52 = vld [vmem:[%s1 + $0x90] sm:$0xff]
    %v53 = vld [vmem:[%s1 + $0x98] sm:$0xff]
    %v54 = vld [vmem:[%s1 + $0xa0] sm:$0xff]
    %v55 = vld [vmem:[%s1 + $0xa8] sm:$0xff]
    %v56 = vld [vmem:[%s1 + $0xb0] sm:$0xff]
    %v57 = vld [vmem:[%s1 + $0xb8] sm:$0xff]
    %v58 = vld [vmem:[%s1 + $0xc0] sm:$0xff]
    %v59 = vld [vmem:[%s1 + $0xc8] sm:$0xff]
    %v60 = vld [vmem:[%s1 + $0xd0] sm:$0xff]
    %v61 = vld [vmem:[%s1 + $0xd8] sm:$0xff]
    %v62 = vld [vmem:[%s1 + $0xe0] sm:$0xff]
    %v63 = vld [vmem:[%s1 + $0xe8] sm:$0xff]
    %v64 = vld [vmem:[%s1 + $0xf0] sm:$0xff]
    %v65 = vld [vmem:[%s1 + $0xf8] sm:$0xff]
    %v66 = vld [vmem:[%s1 + $0x100] sm:$0xff]
    %v67 = vld [vmem:[%s1 + $0x108] sm:$0xff]
    %v68 = vld [vmem:[%s1 + $0x110] sm:$0xff]
    %v69 = vld [vmem:[%s1 + $0x118] sm:$0xff]
    %v70 = vld [vmem:[%s1 + $0x120] sm:$0xff]
    %v71 = vld [vmem:[%s1 + $0x128] sm:$0xff]
    %v72 = vld [vmem:[%s1 + $0x130] sm:$0xff]
    %v73 = vld [vmem:[%s1 + $0x138] sm:$0xff]
    %v74 = vld [vmem:[%s1 + $0x140] sm:$0xff]
    %v75 = vld [vmem:[%s1 + $0x148] sm:$0xff]
    %v76 = vld [vmem:[%s1 + $0x150] sm:$0xff]
    %v77 = vld [vmem:[%s1 + $0x158] sm:$0xff]
    %v78 = vld [vmem:[%s1 + $0x160] sm:$0xff]
    %v79 = vld [vmem:[%s1 + $0x168] sm:$0xff]
    %v80 = vld [vmem:[%s1 + $0x170] sm:$0xff]
    %v81 = vld [vmem:[%s1 + $0x178] sm:$0xff]
    %v82 = vld [vmem:[%s1 + $0x180] sm:$0xff]
    %v83 = vld [vmem:[%s1 + $0x188] sm:$0xff]
    %v84 = vld [vmem:[%s1 + $0x190] sm:$0xff]
    %v85 = vld [vmem:[%s1 + $0x198] sm:$0xff]
    %v86 = vld [vmem:[%s1 + $0x1a0] sm:$0xff]
    %v87 = vld [vmem:[%s1 + $0x1a8] sm:$0xff]
    %v88 = vld [vmem:[%s1 + $0x1b0] sm:$0xff]
    %v89 = vld [vmem:[%s1 + $0x1b8] sm:$0xff]
    %v90 = vld [vmem:[%s1 + $0x1c0] sm:$0xff]
    %v91 = vld [vmem:[%s1 + $0x1c8] sm:$0xff]
    %v92 = vld [vmem:[%s1 + $0x1d0] sm:$0xff]
    %v93 = vld [vmem:[%s1 + $0x1d8] sm:$0xff]
    %v94 = vld [vmem:[%s1 + $0x1e0] sm:$0xff]
    %v95 = vld [vmem:[%s1 + $0x1e8] sm:$0xff]
    %v96 = vld [vmem:[%s1 + $0x1f0] sm:$0xff]
    %v97 = vld [vmem:[%s1 + $0x1f8] sm:$0xff]
    %v98 = vld [vmem:[%s1 + $0x200] sm:$0xff]
    %v99 = vld [vmem:[%s1 + $0x208] sm:$0xff]
    %v100 = vld [vmem:[%s1 + $0x210] sm:$0xff]
    %v101 = vld [vmem:[%s1 + $0x218] sm:$0xff]
    %v102 = vld [vmem:[%s1 + $0x220] sm:$0xff]
    %v103 = vld [vmem:[%s1 + $0x228] sm:$0xff]
    %v104 = vld [vmem:[%s1 + $0x230] sm:$0xff]
    %v105 = vld [vmem:[%s1 + $0x238] sm:$0xff]
    %v106 = vld [vmem:[%s1 + $0x240] sm:$0xff]
    %v107 = vld [vmem:[%s1 + $0x248] sm:$0xff]
    %v108 = vld [vmem:[%s1 + $0x250] sm:$0xff]
    %v109 = vld [vmem:[%s1 + $0x258] sm:$0xff]
    %v110 = vld [vmem:[%s1 + $0x260] sm:$0xff]
    %v111 = vld [vmem:[%s1 + $0x268] sm:$0xff]
    %v112 = vld [vmem:[%s1 + $0x270] sm:$0xff]
    %v113 = vld [vmem:[%s1 + $0x278] sm:$0xff]
    %v114 = vld [vmem:[%s1 + $0x280] sm:$0xff]
    %v115 = vld [vmem:[%s1 + $0x288] sm:$0xff]
    %v116 = vld [vmem:[%s1 + $0x290] sm:$0xff]
    %v117 = vld [vmem:[%s1 + $0x298] sm:$0xff]
    %v118 = vld [vmem:[%s1 + $0x2a0] sm:$0xff]
    %v119 = vld [vmem:[%s1 + $0x2a8] sm:$0xff]
    %v120 = vld [vmem:[%s1 + $0x2b0] sm:$0xff]
    %v121 = vld [vmem:[%s1 + $0x2b8] sm:$0xff]
    %v122 = vld [vmem:[%s1 + $0x2c0] sm:$0xff]
    %v123 = vld [vmem:[%s1 + $0x2c8] sm:$0xff]
    %v124 = vld [vmem:[%s1 + $0x2d0] sm:$0xff]
    %v125 = vld [vmem:[%s1 + $0x2d8] sm:$0xff]
    %v126 = vld [vmem:[%s1 + $0x2e0] sm:$0xff]
    %v127 = vld [vmem:[%s1 + $0x2e8] sm:$0xff]
    %v128 = vld [vmem:[%s1 + $0x2f0] sm:$0xff]
    %v129 = vld [vmem:[%s1 + $0x2f8] sm:$0xff]
    %v130 = vld [vmem:[%s1 + $0x300] sm:$0xff]
    %v131 = vld [vmem:[%s1 + $0x308] sm:$0xff]
    %v132 = vld [vmem:[%s2] sm:$0x1]
    %v134 = vlaneseq
    %v135 = vshrl.u32 %v134, 7
    %v136 = vsub.s32 0, %v135
    %v137 = vrot.slane %v132, %v136
    %vm139 = vcmask 130048
    %v141 = vsel %vm139, %v33, 0
    %143 = vmatprep.subr.mxu0 0.0
    %144 = vmatpush1.msra.mxu0 %v34
    %145 = vmatprep.subr.mxu0 0.0
    %146 = vmatpush1.msra.mxu0 %v35
    %147 = vmatprep.subr.mxu0 0.0
    %148 = vmatpush1.msra.mxu0 %v36
    %149 = vmatprep.subr.mxu0 0.0
    %150 = vmatpush1.msra.mxu0 %v37
    %151 = vmatprep.subr.mxu0 0.0
    %152 = vmatpush1.msra.mxu0 %v38
    %153 = vmatprep.subr.mxu0 0.0
    %154 = vmatpush1.msra.mxu0 %v39
    %155 = vmatprep.subr.mxu0 0.0
    %156 = vmatpush1.msra.mxu0 %v40
    %157 = vmatprep.subr.mxu0 0.0
    %158 = vmatpush1.msra.mxu0 %v41
    %159 = vmatprep.subr.mxu0 0.0
    %160 = vmatpush1.msra.mxu0 %v42
    %161 = vmatprep.subr.mxu0 0.0
    %162 = vmatpush1.msra.mxu0 %v43
    %163 = vmatprep.subr.mxu0 0.0
    %164 = vmatpush1.msra.mxu0 %v44
    %165 = vmatprep.subr.mxu0 0.0
    %166 = vmatpush1.msra.mxu0 %v45
    %167 = vmatprep.subr.mxu0 0.0
    %168 = vmatpush1.msra.mxu0 %v46
    %169 = vmatprep.subr.mxu0 0.0
    %170 = vmatpush1.msra.mxu0 %v47
    %171 = vmatprep.subr.mxu0 0.0
    %172 = vmatpush1.msra.mxu0 %v48
    %173 = vmatprep.subr.mxu0 0.0
    %174 = vmatpush1.msra.mxu0 %v49
    %175 = vmatprep.subr.mxu0 0.0
    %176 = vmatpush1.msra.mxu0 %v50
    %177 = vmatprep.subr.mxu0 0.0
    %178 = vmatpush1.msra.mxu0 %v51
    %179 = vmatprep.subr.mxu0 0.0
    %180 = vmatpush1.msra.mxu0 %v52
    %181 = vmatprep.subr.mxu0 0.0
    %182 = vmatpush1.msra.mxu0 %v53
    %183 = vmatprep.subr.mxu0 0.0
    %184 = vmatpush1.msra.mxu0 %v54
    %185 = vmatprep.subr.mxu0 0.0
    %186 = vmatpush1.msra.mxu0 %v55
    %187 = vmatprep.subr.mxu0 0.0
    %188 = vmatpush1.msra.mxu0 %v56
    %189 = vmatprep.subr.mxu0 0.0
    %190 = vmatpush1.msra.mxu0 %v57
    %191 = vmatprep.subr.mxu0 0.0
    %192 = vmatpush1.msra.mxu0 %v58
    %193 = vmatprep.subr.mxu0 0.0
    %194 = vmatpush1.msra.mxu0 %v59
    %195 = vmatprep.subr.mxu0 0.0
    %196 = vmatpush1.msra.mxu0 %v60
    %197 = vmatprep.subr.mxu0 0.0
    %198 = vmatpush1.msra.mxu0 %v61
    %199 = vmatprep.subr.mxu0 0.0
    %200 = vmatpush1.msra.mxu0 %v62
    %201 = vmatprep.subr.mxu0 0.0
    %202 = vmatpush1.msra.mxu0 %v63
    %203 = vmatprep.subr.mxu0 0.0
    %204 = vmatpush1.msra.mxu0 %v64
    %205 = vmatprep.subr.mxu0 0.0
    %206 = vmatpush1.msra.mxu0 %v65
    %207 = vmatprep.mubr.f32.mxu0 %v28
    %208 = vmatmul.mubr.f32.gmra.mrb[0].mxu0 %v27
    %v209 = vpop.f32.mrb[0].mxu0
    %v210 = vadd.f32 %v137, %v209
    %v211 = vpop.f32.mrb[0].mxu0
    %212 = vdwg.mxu0
    %213 = vmatprep.subr.mxu0 0.0
    %214 = vmatpush1.msra.mxu0 %v66
    %215 = vmatprep.subr.mxu0 0.0
    %216 = vmatpush1.msra.mxu0 %v67
    %217 = vmatprep.subr.mxu0 0.0
    %218 = vmatpush1.msra.mxu0 %v68
    %219 = vmatprep.subr.mxu0 0.0
    %220 = vmatpush1.msra.mxu0 %v69
    %221 = vmatprep.subr.mxu0 0.0
    %222 = vmatpush1.msra.mxu0 %v70
    %223 = vmatprep.subr.mxu0 0.0
    %224 = vmatpush1.msra.mxu0 %v71
    %225 = vmatprep.subr.mxu0 0.0
    %226 = vmatpush1.msra.mxu0 %v72
    %227 = vmatprep.subr.mxu0 0.0
    %228 = vmatpush1.msra.mxu0 %v73
    %229 = vmatprep.subr.mxu0 0.0
    %230 = vmatpush1.msra.mxu0 %v74
    %231 = vmatprep.subr.mxu0 0.0
    %232 = vmatpush1.msra.mxu0 %v75
    %233 = vmatprep.subr.mxu0 0.0
    %234 = vmatpush1.msra.mxu0 %v76
    %235 = vmatprep.subr.mxu0 0.0
    %236 = vmatpush1.msra.mxu0 %v77
    %237 = vmatprep.subr.mxu0 0.0
    %238 = vmatpush1.msra.mxu0 %v78
    %239 = vmatprep.subr.mxu0 0.0
    %240 = vmatpush1.msra.mxu0 %v79
    %241 = vmatprep.subr.mxu0 0.0
    %242 = vmatpush1.msra.mxu0 %v80
    %243 = vmatprep.subr.mxu0 0.0
    %244 = vmatpush1.msra.mxu0 %v81
    %245 = vmatprep.subr.mxu0 0.0
    %246 = vmatpush1.msra.mxu0 %v82
    %247 = vmatprep.subr.mxu0 0.0
    %248 = vmatpush1.msra.mxu0 %v83
    %249 = vmatprep.subr.mxu0 0.0
    %250 = vmatpush1.msra.mxu0 %v84
    %251 = vmatprep.subr.mxu0 0.0
    %252 = vmatpush1.msra.mxu0 %v85
    %253 = vmatprep.subr.mxu0 0.0
    %254 = vmatpush1.msra.mxu0 %v86
    %255 = vmatprep.subr.mxu0 0.0
    %256 = vmatpush1.msra.mxu0 %v87
    %257 = vmatprep.subr.mxu0 0.0
    %258 = vmatpush1.msra.mxu0 %v88
    %259 = vmatprep.subr.mxu0 0.0
    %260 = vmatpush1.msra.mxu0 %v89
    %261 = vmatprep.subr.mxu0 0.0
    %262 = vmatpush1.msra.mxu0 %v90
    %263 = vmatprep.subr.mxu0 0.0
    %264 = vmatpush1.msra.mxu0 %v91
    %265 = vmatprep.subr.mxu0 0.0
    %266 = vmatpush1.msra.mxu0 %v92
    %267 = vmatprep.subr.mxu0 0.0
    %268 = vmatpush1.msra.mxu0 %v93
    %269 = vmatprep.subr.mxu0 0.0
    %270 = vmatpush1.msra.mxu0 %v94
    %271 = vmatprep.subr.mxu0 0.0
    %272 = vmatpush1.msra.mxu0 %v95
    %273 = vmatprep.subr.mxu0 0.0
    %274 = vmatpush1.msra.mxu0 %v96
    %275 = vmatprep.subr.mxu0 0.0
    %276 = vmatpush1.msra.mxu0 %v97
    %277 = vmatprep.mubr.f32.mxu0 %v30
    %278 = vmatmul.mubr.f32.gmra.mrb[0].mxu0 %v29
    %v279 = vpop.f32.mrb[0].mxu0
    %v280 = vadd.f32 %v210, %v279
    %v281 = vpop.f32.mrb[0].mxu0
    %282 = vdwg.mxu0
    %283 = vmatprep.subr.mxu0 0.0
    %284 = vmatpush1.msra.mxu0 %v98
    %285 = vmatprep.subr.mxu0 0.0
    %286 = vmatpush1.msra.mxu0 %v99
    %287 = vmatprep.subr.mxu0 0.0
    %288 = vmatpush1.msra.mxu0 %v100
    %289 = vmatprep.subr.mxu0 0.0
    %290 = vmatpush1.msra.mxu0 %v101
    %291 = vmatprep.subr.mxu0 0.0
    %292 = vmatpush1.msra.mxu0 %v102
    %293 = vmatprep.subr.mxu0 0.0
    %294 = vmatpush1.msra.mxu0 %v103
    %295 = vmatprep.subr.mxu0 0.0
    %296 = vmatpush1.msra.mxu0 %v104
    %297 = vmatprep.subr.mxu0 0.0
    %298 = vmatpush1.msra.mxu0 %v105
    %299 = vmatprep.subr.mxu0 0.0
    %300 = vmatpush1.msra.mxu0 %v106
    %301 = vmatprep.subr.mxu0 0.0
    %302 = vmatpush1.msra.mxu0 %v107
    %303 = vmatprep.subr.mxu0 0.0
    %304 = vmatpush1.msra.mxu0 %v108
    %305 = vmatprep.subr.mxu0 0.0
    %306 = vmatpush1.msra.mxu0 %v109
    %307 = vmatprep.subr.mxu0 0.0
    %308 = vmatpush1.msra.mxu0 %v110
    %309 = vmatprep.subr.mxu0 0.0
    %310 = vmatpush1.msra.mxu0 %v111
    %311 = vmatprep.subr.mxu0 0.0
    %312 = vmatpush1.msra.mxu0 %v112
    %313 = vmatprep.subr.mxu0 0.0
    %314 = vmatpush1.msra.mxu0 %v113
    %315 = vmatprep.subr.mxu0 0.0
    %316 = vmatpush1.msra.mxu0 %v114
    %317 = vmatprep.subr.mxu0 0.0
    %318 = vmatpush1.msra.mxu0 %v115
    %319 = vmatprep.subr.mxu0 0.0
    %320 = vmatpush1.msra.mxu0 %v116
    %321 = vmatprep.subr.mxu0 0.0
    %322 = vmatpush1.msra.mxu0 %v117
    %323 = vmatprep.subr.mxu0 0.0
    %324 = vmatpush1.msra.mxu0 %v118
    %325 = vmatprep.subr.mxu0 0.0
    %326 = vmatpush1.msra.mxu0 %v119
    %327 = vmatprep.subr.mxu0 0.0
    %328 = vmatpush1.msra.mxu0 %v120
    %329 = vmatprep.subr.mxu0 0.0
    %330 = vmatpush1.msra.mxu0 %v121
    %331 = vmatprep.subr.mxu0 0.0
    %332 = vmatpush1.msra.mxu0 %v122
    %333 = vmatprep.subr.mxu0 0.0
    %334 = vmatpush1.msra.mxu0 %v123
    %335 = vmatprep.subr.mxu0 0.0
    %336 = vmatpush1.msra.mxu0 %v124
    %337 = vmatprep.subr.mxu0 0.0
    %338 = vmatpush1.msra.mxu0 %v125
    %339 = vmatprep.subr.mxu0 0.0
    %340 = vmatpush1.msra.mxu0 %v126
    %341 = vmatprep.subr.mxu0 0.0
    %342 = vmatpush1.msra.mxu0 %v127
    %343 = vmatprep.subr.mxu0 0.0
    %344 = vmatpush1.msra.mxu0 %v128
    %345 = vmatprep.subr.mxu0 0.0
    %346 = vmatpush1.msra.mxu0 %v129
    %347 = vmatprep.mubr.f32.mxu0 %v32
    %348 = vmatmul.mubr.f32.gmra.mrb[0].mxu0 %v31
    %v349 = vpop.f32.mrb[0].mxu0
    %v350 = vadd.f32 %v280, %v349
    %v351 = vpop.f32.mrb[0].mxu0
    %352 = vdwg.mxu0
    %353 = vmatprep.subr.mxu0 0.0
    %354 = vmatpush1.msra.mxu0 %v130
    %355 = vmatprep.subr.mxu0 0.0
    %356 = vmatpush1.msra.mxu0 %v131
    %357 = vmatprep.subr.mxu0 0.0
    %358 = vmatpush1.msra.mxu0 0.0
    %359 = vmatprep.subr.mxu0 0.0
    %360 = vmatpush1.msra.mxu0 0.0
    %361 = vmatprep.subr.mxu0 0.0
    %362 = vmatpush1.msra.mxu0 0.0
    %363 = vmatprep.subr.mxu0 0.0
    %364 = vmatpush1.msra.mxu0 0.0
    %365 = vmatprep.subr.mxu0 0.0
    %366 = vmatpush1.msra.mxu0 0.0
    %367 = vmatprep.subr.mxu0 0.0
    %368 = vmatpush1.msra.mxu0 0.0
    %369 = vmatprep.subr.mxu0 0.0
    %370 = vmatpush1.msra.mxu0 0.0
    %371 = vmatprep.subr.mxu0 0.0
    %372 = vmatpush1.msra.mxu0 0.0
    %373 = vmatprep.subr.mxu0 0.0
    %374 = vmatpush1.msra.mxu0 0.0
    %375 = vmatprep.subr.mxu0 0.0
    %376 = vmatpush1.msra.mxu0 0.0
    %377 = vmatprep.subr.mxu0 0.0
    %378 = vmatpush1.msra.mxu0 0.0
    %379 = vmatprep.subr.mxu0 0.0
    %380 = vmatpush1.msra.mxu0 0.0
    %381 = vmatprep.subr.mxu0 0.0
    %382 = vmatpush1.msra.mxu0 0.0
    %383 = vmatprep.subr.mxu0 0.0
    %384 = vmatpush1.msra.mxu0 0.0
    %385 = vmatprep.subr.mxu0 0.0
    %386 = vmatpush1.msra.mxu0 0.0
    %387 = vmatprep.subr.mxu0 0.0
    %388 = vmatpush1.msra.mxu0 0.0
    %389 = vmatprep.subr.mxu0 0.0
    %390 = vmatpush1.msra.mxu0 0.0
    %391 = vmatprep.subr.mxu0 0.0
    %392 = vmatpush1.msra.mxu0 0.0
    %393 = vmatprep.subr.mxu0 0.0
    %394 = vmatpush1.msra.mxu0 0.0
    %395 = vmatprep.subr.mxu0 0.0
    %396 = vmatpush1.msra.mxu0 0.0
    %397 = vmatprep.subr.mxu0 0.0
    %398 = vmatpush1.msra.mxu0 0.0
    %399 = vmatprep.subr.mxu0 0.0
    %400 = vmatpush1.msra.mxu0 0.0
    %401 = vmatprep.subr.mxu0 0.0
    %402 = vmatpush1.msra.mxu0 0.0
    %403 = vmatprep.subr.mxu0 0.0
    %404 = vmatpush1.msra.mxu0 0.0
    %405 = vmatprep.subr.mxu0 0.0
    %406 = vmatpush1.msra.mxu0 0.0
    %407 = vmatprep.subr.mxu0 0.0
    %408 = vmatpush1.msra.mxu0 0.0
    %409 = vmatprep.subr.mxu0 0.0
    %410 = vmatpush1.msra.mxu0 0.0
    %411 = vmatprep.subr.mxu0 0.0
    %412 = vmatpush1.msra.mxu0 0.0
    %413 = vmatprep.subr.mxu0 0.0
    %414 = vmatpush1.msra.mxu0 0.0
    %415 = vmatprep.subr.mxu0 0.0
    %416 = vmatpush1.msra.mxu0 0.0
    %417 = vmatprep.mubr.f32.mxu0 0.0
    %418 = vmatmul.mubr.f32.gmra.mrb[0].mxu0 %v141
    %v419 = vpop.f32.mrb[0].mxu0
    %v420 = vadd.f32 %v350, %v419
    %v421 = vpop.f32.mrb[0].mxu0
    %422 = vdwg.mxu0
    %vm423 = vcmp.gt.f32.partialorder %v420, 20.0
    %v424 = vmin.f32 %v420, 20.0
    %v425 = vmul.f32 %v424, 1.442695
    %v426 = vpow.pop %v425
    %v427 = vadd.f32 %v426, 1.0
    %v428 = vlog2.pop %v427
    %v429 = vmul.f32 %v428, 0.6931472
    %v430 = vmul.f32 -0.5, %v426
    %v431 = vadd.f32 %v430, 1.0
    %v432 = vmul.f32 %v431, %v426
    %v433 = vand.u32 2147483647, %v426
    %vm434 = vcmp.lt.f32.partialorder %v433, 0.0004427343
    %v435 = vsel %vm434, %v432, %v429
    %v436 = vsel %vm423, %v420, %v435
    %vm437 = vcmask 326656
    %438 = vst.msk [vmem:[#allocation4] sm:$0xff] %vm437, %v436
    %v439 = vld [vmem:[%s5] sm:$0x1]
    %v440 = vld [vmem:[%s5 + $0x1] sm:$0x1]
    %v441 = vld [vmem:[%s5 + $0x2] sm:$0x1]
    %v442 = vld [vmem:[%s5 + $0x3] sm:$0x1]
    %v443 = vld [vmem:[%s5 + $0x4] sm:$0x1]
    %v444 = vld [vmem:[%s5 + $0x5] sm:$0x1]
    %v445 = vld [vmem:[%s5 + $0x6] sm:$0x1]
    %v446 = vld [vmem:[%s5 + $0x7] sm:$0x1]
    %v447 = vld [vmem:[%s5 + $0x8] sm:$0x1]
    %v448 = vld [vmem:[%s5 + $0x9] sm:$0x1]
    %v459 = vlaneseq
    %v460 = vshrl.u32 %v459, 7
    %v461 = vsub.s32 0, %v460
    %v462 = vrot.slane %v439, %v461
    %v463 = vlaneseq
    %v464 = vshrl.u32 %v463, 7
    %v465 = vsub.s32 0, %v464
    %v466 = vrot.slane %v440, %v465
    %v467 = vlaneseq
    %v468 = vshrl.u32 %v467, 7
    %v469 = vsub.s32 0, %v468
    %v470 = vrot.slane %v441, %v469
    %v471 = vlaneseq
    %v472 = vshrl.u32 %v471, 7
    %v473 = vsub.s32 0, %v472
    %v474 = vrot.slane %v442, %v473
    %v475 = vlaneseq
    %v476 = vshrl.u32 %v475, 7
    %v477 = vsub.s32 0, %v476
    %v478 = vrot.slane %v443, %v477
    %v479 = vlaneseq
    %v480 = vshrl.u32 %v479, 7
    %v481 = vsub.s32 0, %v480
    %v482 = vrot.slane %v444, %v481
    %v483 = vlaneseq
    %v484 = vshrl.u32 %v483, 7
    %v485 = vsub.s32 0, %v484
    %v486 = vrot.slane %v445, %v485
    %v487 = vlaneseq
    %v488 = vshrl.u32 %v487, 7
    %v489 = vsub.s32 0, %v488
    %v490 = vrot.slane %v446, %v489
    %v491 = vlaneseq
    %v492 = vshrl.u32 %v491, 7
    %v493 = vsub.s32 0, %v492
    %v494 = vrot.slane %v447, %v493
    %v495 = vlaneseq
    %v496 = vshrl.u32 %v495, 7
    %v497 = vsub.s32 0, %v496
    %v498 = vrot.slane %v448, %v497
    %510 = vrot.lane.b32.xlu0 %v436, 108
    %v511 = vpop.permute.xlu0 %510
    %v513 = vmul.f32 %v462, %v511
    %v514 = vmul.f32 %v466, %v511
    %v515 = vmul.f32 %v470, %v511
    %v516 = vmul.f32 %v474, %v511
    %v517 = vmul.f32 %v478, %v511
    %v518 = vmul.f32 %v482, %v511
    %v519 = vmul.f32 %v486, %v511
    %v520 = vmul.f32 %v490, %v511
    %v521 = vmul.f32 %v494, %v511
    %v522 = vmul.f32 %v498, %v511
    %v523 = vadd.f32 %v436, %v513
    %v524 = vadd.f32 %v436, %v514
    %v525 = vadd.f32 %v436, %v515
    %v526 = vadd.f32 %v436, %v516
    %v527 = vadd.f32 %v436, %v517
    %v528 = vadd.f32 %v436, %v518
    %v529 = vadd.f32 %v436, %v519
    %v530 = vadd.f32 %v436, %v520
    %v531 = vadd.f32 %v436, %v521
    %v532 = vadd.f32 %v436, %v522
    %v533 = vld [vmem:[%s3] sm:$0xff]
    %v534 = vld [vmem:[%s3 + $0x8] sm:$0xff]
    %v535 = vld [vmem:[%s3 + $0x10] sm:$0xff]
    %v536 = vld [vmem:[%s3 + $0x18] sm:$0xff]
    %v537 = vld [vmem:[%s3 + $0x20] sm:$0xff]
    %v538 = vld [vmem:[%s3 + $0x28] sm:$0xff]
    %v539 = vld [vmem:[%s3 + $0x30] sm:$0xff]
    %v540 = vld [vmem:[%s3 + $0x38] sm:$0xff]
    %v541 = vld [vmem:[%s3 + $0x40] sm:$0xff]
    %v542 = vld [vmem:[%s3 + $0x48] sm:$0xff]
    %v543 = vld [vmem:[%s3 + $0x50] sm:$0xff]
    %v544 = vld [vmem:[%s3 + $0x58] sm:$0xff]
    %v545 = vld [vmem:[%s3 + $0x60] sm:$0xff]
    %v546 = vld [vmem:[%s3 + $0x68] sm:$0xff]
    %v547 = vld [vmem:[%s3 + $0x70] sm:$0xf]
    %v548 = vld [vmem:[%s3 + $0x78] sm:$0xf]
    %v549 = vld [vmem:[%s3 + $0x80] sm:$0xf]
    %v550 = vld [vmem:[%s3 + $0x88] sm:$0xf]
    %v551 = vld [vmem:[%s3 + $0x90] sm:$0xf]
    %v552 = vld [vmem:[%s3 + $0x98] sm:$0xf]
    %v553 = vld [vmem:[%s3 + $0xa0] sm:$0xf]
    %v554 = vld [vmem:[%s4] sm:$0x7f]
    %v556 = vlaneseq
    %v557 = vshrl.u32 %v556, 7
    %v558 = vsub.s32 0, %v557
    %v559 = vrot.slane %v554, %v558
    %v560 = vlaneseq
    %v561 = vshrl.u32 %v560, 7
    %v562 = vsub.s32 1, %v561
    %v563 = vrot.slane %v554, %v562
    %v564 = vlaneseq
    %v565 = vshrl.u32 %v564, 7
    %v566 = vsub.s32 2, %v565
    %v567 = vrot.slane %v554, %v566
    %v568 = vlaneseq
    %v569 = vshrl.u32 %v568, 7
    %v570 = vsub.s32 3, %v569
    %v571 = vrot.slane %v554, %v570
    %v572 = vlaneseq
    %v573 = vshrl.u32 %v572, 7
    %v574 = vsub.s32 4, %v573
    %v575 = vrot.slane %v554, %v574
    %v576 = vlaneseq
    %v577 = vshrl.u32 %v576, 7
    %v578 = vsub.s32 5, %v577
    %v579 = vrot.slane %v554, %v578
    %v580 = vlaneseq
    %v581 = vshrl.u32 %v580, 7
    %v582 = vsub.s32 6, %v581
    %v583 = vrot.slane %v554, %v582
    %vm591 = vcmask 162816
    %v593 = vsel %vm591, %v523, 0
    %v596 = vsel %vm591, %v524, 0
    %v599 = vsel %vm591, %v525, 0
    %v602 = vsel %vm591, %v526, 0
    %v605 = vsel %vm591, %v527, 0
    %v608 = vsel %vm591, %v528, 0
    %v611 = vsel %vm591, %v529, 0
    %v614 = vsel %vm591, %v530, 0
    %v617 = vsel %vm591, %v531, 0
    %v620 = vsel %vm591, %v532, 0
    %vm622 = vcmask 1043456
    %v624 = vsel %vm622, %v547, 0
    %v627 = vsel %vm622, %v548, 0
    %v630 = vsel %vm622, %v549, 0
    %v633 = vsel %vm622, %v550, 0
    %v636 = vsel %vm622, %v551, 0
    %v639 = vsel %vm622, %v552, 0
    %v642 = vsel %vm622, %v553, 0
    %644 = vmatprep.subr.mxu0 %v534
    %645 = vmatpush1.msra.mxu0 %v533
    %646 = vmatprep.subr.mxu0 %v541
    %647 = vmatpush1.msra.mxu0 %v540
    %648 = vmatprep.subr.mxu0 %v627
    %649 = vmatpush1.msra.mxu0 %v624
    %650 = vmatprep.subr.mxu0 0.0
    %651 = vmatpush1.msra.mxu0 0.0
    %652 = vmatprep.subr.mxu0 0.0
    %653 = vmatpush1.msra.mxu0 0.0
    %654 = vmatprep.subr.mxu0 0.0
    %655 = vmatpush1.msra.mxu0 0.0
    %656 = vmatprep.subr.mxu0 0.0
    %657 = vmatpush1.msra.mxu0 0.0
    %658 = vmatprep.subr.mxu0 0.0
    %659 = vmatpush1.msra.mxu0 0.0
    %660 = vmatprep.subr.mxu0 0.0
    %661 = vmatpush1.msra.mxu0 0.0
    %662 = vmatprep.subr.mxu0 0.0
    %663 = vmatpush1.msra.mxu0 0.0
    %664 = vmatprep.subr.mxu0 0.0
    %665 = vmatpush1.msra.mxu0 0.0
    %666 = vmatprep.subr.mxu0 0.0
    %667 = vmatpush1.msra.mxu0 0.0
    %668 = vmatprep.subr.mxu0 0.0
    %669 = vmatpush1.msra.mxu0 0.0
    %670 = vmatprep.subr.mxu0 0.0
    %671 = vmatpush1.msra.mxu0 0.0
    %672 = vmatprep.subr.mxu0 0.0
    %673 = vmatpush1.msra.mxu0 0.0
    %674 = vmatprep.subr.mxu0 0.0
    %675 = vmatpush1.msra.mxu0 0.0
    %676 = vmatprep.subr.mxu0 0.0
    %677 = vmatpush1.msra.mxu0 0.0
    %678 = vmatprep.subr.mxu0 0.0
    %679 = vmatpush1.msra.mxu0 0.0
    %680 = vmatprep.subr.mxu0 0.0
    %681 = vmatpush1.msra.mxu0 0.0
    %682 = vmatprep.subr.mxu0 0.0
    %683 = vmatpush1.msra.mxu0 0.0
    %684 = vmatprep.subr.mxu0 0.0
    %685 = vmatpush1.msra.mxu0 0.0
    %686 = vmatprep.subr.mxu0 0.0
    %687 = vmatpush1.msra.mxu0 0.0
    %688 = vmatprep.subr.mxu0 0.0
    %689 = vmatpush1.msra.mxu0 0.0
    %690 = vmatprep.subr.mxu0 0.0
    %691 = vmatpush1.msra.mxu0 0.0
    %692 = vmatprep.subr.mxu0 0.0
    %693 = vmatpush1.msra.mxu0 0.0
    %694 = vmatprep.subr.mxu0 0.0
    %695 = vmatpush1.msra.mxu0 0.0
    %696 = vmatprep.subr.mxu0 0.0
    %697 = vmatpush1.msra.mxu0 0.0
    %698 = vmatprep.subr.mxu0 0.0
    %699 = vmatpush1.msra.mxu0 0.0
    %700 = vmatprep.subr.mxu0 0.0
    %701 = vmatpush1.msra.mxu0 0.0
    %702 = vmatprep.subr.mxu0 0.0
    %703 = vmatpush1.msra.mxu0 0.0
    %704 = vmatprep.subr.mxu0 0.0
    %705 = vmatpush1.msra.mxu0 0.0
    %706 = vmatprep.subr.mxu0 0.0
    %707 = vmatpush1.msra.mxu0 0.0
    %708 = vmatprep.mubr.f32.mxu0 0.0
    %709 = vmatmul.mubr.f32.gmra.mrb[0].mxu0 %v593
    %v710 = vpop.f32.mrb[0].mxu0
    %v711 = vadd.f32 %v559, %v710
    %v712 = vpop.f32.mrb[0].mxu0
    %v713 = vadd.f32 %v563, %v712
    %714 = vmatprep.mubr.f32.mxu0 0.0
    %715 = vmatmul.mubr.f32.gmra.mrb[0].mxu0 %v596
    %v716 = vpop.f32.mrb[0].mxu0
    %v717 = vadd.f32 %v559, %v716
    %v718 = vpop.f32.mrb[0].mxu0
    %v719 = vadd.f32 %v563, %v718
    %720 = vmatprep.mubr.f32.mxu0 0.0
    %721 = vmatmul.mubr.f32.gmra.mrb[0].mxu0 %v599
    %v722 = vpop.f32.mrb[0].mxu0
    %v723 = vadd.f32 %v559, %v722
    %v724 = vpop.f32.mrb[0].mxu0
    %v725 = vadd.f32 %v563, %v724
    %726 = vmatprep.mubr.f32.mxu0 0.0
    %727 = vmatmul.mubr.f32.gmra.mrb[0].mxu0 %v602
    %v728 = vpop.f32.mrb[0].mxu0
    %v729 = vadd.f32 %v559, %v728
    %v730 = vpop.f32.mrb[0].mxu0
    %v731 = vadd.f32 %v563, %v730
    %732 = vmatprep.mubr.f32.mxu0 0.0
    %733 = vmatmul.mubr.f32.gmra.mrb[0].mxu0 %v605
    %v734 = vpop.f32.mrb[0].mxu0
    %v735 = vadd.f32 %v559, %v734
    %v736 = vpop.f32.mrb[0].mxu0
    %v737 = vadd.f32 %v563, %v736
    %738 = vmatprep.mubr.f32.mxu0 0.0
    %739 = vmatmul.mubr.f32.gmra.mrb[0].mxu0 %v608
    %v740 = vpop.f32.mrb[0].mxu0
    %v741 = vadd.f32 %v559, %v740
    %v742 = vpop.f32.mrb[0].mxu0
    %v743 = vadd.f32 %v563, %v742
    %744 = vmatprep.mubr.f32.mxu0 0.0
    %745 = vmatmul.mubr.f32.gmra.mrb[0].mxu0 %v611
    %v746 = vpop.f32.mrb[0].mxu0
    %v747 = vadd.f32 %v559, %v746
    %v748 = vpop.f32.mrb[0].mxu0
    %v749 = vadd.f32 %v563, %v748
    %750 = vmatprep.mubr.f32.mxu0 0.0
    %751 = vmatmul.mubr.f32.gmra.mrb[0].mxu0 %v614
    %v752 = vpop.f32.mrb[0].mxu0
    %v753 = vadd.f32 %v559, %v752
    %v754 = vpop.f32.mrb[0].mxu0
    %v755 = vadd.f32 %v563, %v754
    %756 = vmatprep.mubr.f32.mxu0 0.0
    %757 = vmatmul.mubr.f32.gmra.mrb[0].mxu0 %v617
    %v758 = vpop.f32.mrb[0].mxu0
    %v759 = vadd.f32 %v559, %v758
    %v760 = vpop.f32.mrb[0].mxu0
    %v761 = vadd.f32 %v563, %v760
    %762 = vmatprep.mubr.f32.mxu0 0.0
    %763 = vmatmul.mubr.f32.gmra.mrb[0].mxu0 %v620
    %v764 = vpop.f32.mrb[0].mxu0
    %v765 = vadd.f32 %v559, %v764
    %v766 = vpop.f32.mrb[0].mxu0
    %v767 = vadd.f32 %v563, %v766
    %768 = vdwg.mxu0
    %769 = vmatprep.subr.mxu0 %v536
    %770 = vmatpush1.msra.mxu0 %v535
    %771 = vmatprep.subr.mxu0 %v543
    %772 = vmatpush1.msra.mxu0 %v542
    %773 = vmatprep.subr.mxu0 %v633
    %774 = vmatpush1.msra.mxu0 %v630
    %775 = vmatprep.subr.mxu0 0.0
    %776 = vmatpush1.msra.mxu0 0.0
    %777 = vmatprep.subr.mxu0 0.0
    %778 = vmatpush1.msra.mxu0 0.0
    %779 = vmatprep.subr.mxu0 0.0
    %780 = vmatpush1.msra.mxu0 0.0
    %781 = vmatprep.subr.mxu0 0.0
    %782 = vmatpush1.msra.mxu0 0.0
    %783 = vmatprep.subr.mxu0 0.0
    %784 = vmatpush1.msra.mxu0 0.0
    %785 = vmatprep.subr.mxu0 0.0
    %786 = vmatpush1.msra.mxu0 0.0
    %787 = vmatprep.subr.mxu0 0.0
    %788 = vmatpush1.msra.mxu0 0.0
    %789 = vmatprep.subr.mxu0 0.0
    %790 = vmatpush1.msra.mxu0 0.0
    %791 = vmatprep.subr.mxu0 0.0
    %792 = vmatpush1.msra.mxu0 0.0
    %793 = vmatprep.subr.mxu0 0.0
    %794 = vmatpush1.msra.mxu0 0.0
    %795 = vmatprep.subr.mxu0 0.0
    %796 = vmatpush1.msra.mxu0 0.0
    %797 = vmatprep.subr.mxu0 0.0
    %798 = vmatpush1.msra.mxu0 0.0
    %799 = vmatprep.subr.mxu0 0.0
    %800 = vmatpush1.msra.mxu0 0.0
    %801 = vmatprep.subr.mxu0 0.0
    %802 = vmatpush1.msra.mxu0 0.0
    %803 = vmatprep.subr.mxu0 0.0
    %804 = vmatpush1.msra.mxu0 0.0
    %805 = vmatprep.subr.mxu0 0.0
    %806 = vmatpush1.msra.mxu0 0.0
    %807 = vmatprep.subr.mxu0 0.0
    %808 = vmatpush1.msra.mxu0 0.0
    %809 = vmatprep.subr.mxu0 0.0
    %810 = vmatpush1.msra.mxu0 0.0
    %811 = vmatprep.subr.mxu0 0.0
    %812 = vmatpush1.msra.mxu0 0.0
    %813 = vmatprep.subr.mxu0 0.0
    %814 = vmatpush1.msra.mxu0 0.0
    %815 = vmatprep.subr.mxu0 0.0
    %816 = vmatpush1.msra.mxu0 0.0
    %817 = vmatprep.subr.mxu0 0.0
    %818 = vmatpush1.msra.mxu0 0.0
    %819 = vmatprep.subr.mxu0 0.0
    %820 = vmatpush1.msra.mxu0 0.0
    %821 = vmatprep.subr.mxu0 0.0
    %822 = vmatpush1.msra.mxu0 0.0
    %823 = vmatprep.subr.mxu0 0.0
    %824 = vmatpush1.msra.mxu0 0.0
    %825 = vmatprep.subr.mxu0 0.0
    %826 = vmatpush1.msra.mxu0 0.0
    %827 = vmatprep.subr.mxu0 0.0
    %828 = vmatpush1.msra.mxu0 0.0
    %829 = vmatprep.subr.mxu0 0.0
    %830 = vmatpush1.msra.mxu0 0.0
    %831 = vmatprep.subr.mxu0 0.0
    %832 = vmatpush1.msra.mxu0 0.0
    %833 = vmatprep.mubr.f32.mxu0 0.0
    %834 = vmatmul.mubr.f32.gmra.mrb[0].mxu0 %v593
    %v835 = vpop.f32.mrb[0].mxu0
    %v836 = vadd.f32 %v567, %v835
    %v837 = vpop.f32.mrb[0].mxu0
    %v838 = vadd.f32 %v571, %v837
    %839 = vmatprep.mubr.f32.mxu0 0.0
    %840 = vmatmul.mubr.f32.gmra.mrb[0].mxu0 %v596
    %v841 = vpop.f32.mrb[0].mxu0
    %v842 = vadd.f32 %v567, %v841
    %v843 = vpop.f32.mrb[0].mxu0
    %v844 = vadd.f32 %v571, %v843
    %845 = vmatprep.mubr.f32.mxu0 0.0
    %846 = vmatmul.mubr.f32.gmra.mrb[0].mxu0 %v599
    %v847 = vpop.f32.mrb[0].mxu0
    %v848 = vadd.f32 %v567, %v847
    %v849 = vpop.f32.mrb[0].mxu0
    %v850 = vadd.f32 %v571, %v849
    %851 = vmatprep.mubr.f32.mxu0 0.0
    %852 = vmatmul.mubr.f32.gmra.mrb[0].mxu0 %v602
    %v853 = vpop.f32.mrb[0].mxu0
    %v854 = vadd.f32 %v567, %v853
    %v855 = vpop.f32.mrb[0].mxu0
    %v856 = vadd.f32 %v571, %v855
    %857 = vmatprep.mubr.f32.mxu0 0.0
    %858 = vmatmul.mubr.f32.gmra.mrb[0].mxu0 %v605
    %v859 = vpop.f32.mrb[0].mxu0
    %v860 = vadd.f32 %v567, %v859
    %v861 = vpop.f32.mrb[0].mxu0
    %v862 = vadd.f32 %v571, %v861
    %863 = vmatprep.mubr.f32.mxu0 0.0
    %864 = vmatmul.mubr.f32.gmra.mrb[0].mxu0 %v608
    %v865 = vpop.f32.mrb[0].mxu0
    %v866 = vadd.f32 %v567, %v865
    %v867 = vpop.f32.mrb[0].mxu0
    %v868 = vadd.f32 %v571, %v867
    %869 = vmatprep.mubr.f32.mxu0 0.0
    %870 = vmatmul.mubr.f32.gmra.mrb[0].mxu0 %v611
    %v871 = vpop.f32.mrb[0].mxu0
    %v872 = vadd.f32 %v567, %v871
    %v873 = vpop.f32.mrb[0].mxu0
    %v874 = vadd.f32 %v571, %v873
    %875 = vmatprep.mubr.f32.mxu0 0.0
    %876 = vmatmul.mubr.f32.gmra.mrb[0].mxu0 %v614
    %v877 = vpop.f32.mrb[0].mxu0
    %v878 = vadd.f32 %v567, %v877
    %v879 = vpop.f32.mrb[0].mxu0
    %v880 = vadd.f32 %v571, %v879
    %881 = vmatprep.mubr.f32.mxu0 0.0
    %882 = vmatmul.mubr.f32.gmra.mrb[0].mxu0 %v617
    %v883 = vpop.f32.mrb[0].mxu0
    %v884 = vadd.f32 %v567, %v883
    %v885 = vpop.f32.mrb[0].mxu0
    %v886 = vadd.f32 %v571, %v885
    %887 = vmatprep.mubr.f32.mxu0 0.0
    %888 = vmatmul.mubr.f32.gmra.mrb[0].mxu0 %v620
    %v889 = vpop.f32.mrb[0].mxu0
    %v890 = vadd.f32 %v567, %v889
    %v891 = vpop.f32.mrb[0].mxu0
    %v892 = vadd.f32 %v571, %v891
    %893 = vdwg.mxu0
    %894 = vmatprep.subr.mxu0 %v538
    %895 = vmatpush1.msra.mxu0 %v537
    %896 = vmatprep.subr.mxu0 %v545
    %897 = vmatpush1.msra.mxu0 %v544
    %898 = vmatprep.subr.mxu0 %v639
    %899 = vmatpush1.msra.mxu0 %v636
    %900 = vmatprep.subr.mxu0 0.0
    %901 = vmatpush1.msra.mxu0 0.0
    %902 = vmatprep.subr.mxu0 0.0
    %903 = vmatpush1.msra.mxu0 0.0
    %904 = vmatprep.subr.mxu0 0.0
    %905 = vmatpush1.msra.mxu0 0.0
    %906 = vmatprep.subr.mxu0 0.0
    %907 = vmatpush1.msra.mxu0 0.0
    %908 = vmatprep.subr.mxu0 0.0
    %909 = vmatpush1.msra.mxu0 0.0
    %910 = vmatprep.subr.mxu0 0.0
    %911 = vmatpush1.msra.mxu0 0.0
    %912 = vmatprep.subr.mxu0 0.0
    %913 = vmatpush1.msra.mxu0 0.0
    %914 = vmatprep.subr.mxu0 0.0
    %915 = vmatpush1.msra.mxu0 0.0
    %916 = vmatprep.subr.mxu0 0.0
    %917 = vmatpush1.msra.mxu0 0.0
    %918 = vmatprep.subr.mxu0 0.0
    %919 = vmatpush1.msra.mxu0 0.0
    %920 = vmatprep.subr.mxu0 0.0
    %921 = vmatpush1.msra.mxu0 0.0
    %922 = vmatprep.subr.mxu0 0.0
    %923 = vmatpush1.msra.mxu0 0.0
    %924 = vmatprep.subr.mxu0 0.0
    %925 = vmatpush1.msra.mxu0 0.0
    %926 = vmatprep.subr.mxu0 0.0
    %927 = vmatpush1.msra.mxu0 0.0
    %928 = vmatprep.subr.mxu0 0.0
    %929 = vmatpush1.msra.mxu0 0.0
    %930 = vmatprep.subr.mxu0 0.0
    %931 = vmatpush1.msra.mxu0 0.0
    %932 = vmatprep.subr.mxu0 0.0
    %933 = vmatpush1.msra.mxu0 0.0
    %934 = vmatprep.subr.mxu0 0.0
    %935 = vmatpush1.msra.mxu0 0.0
    %936 = vmatprep.subr.mxu0 0.0
    %937 = vmatpush1.msra.mxu0 0.0
    %938 = vmatprep.subr.mxu0 0.0
    %939 = vmatpush1.msra.mxu0 0.0
    %940 = vmatprep.subr.mxu0 0.0
    %941 = vmatpush1.msra.mxu0 0.0
    %942 = vmatprep.subr.mxu0 0.0
    %943 = vmatpush1.msra.mxu0 0.0
    %944 = vmatprep.subr.mxu0 0.0
    %945 = vmatpush1.msra.mxu0 0.0
    %946 = vmatprep.subr.mxu0 0.0
    %947 = vmatpush1.msra.mxu0 0.0
    %948 = vmatprep.subr.mxu0 0.0
    %949 = vmatpush1.msra.mxu0 0.0
    %950 = vmatprep.subr.mxu0 0.0
    %951 = vmatpush1.msra.mxu0 0.0
    %952 = vmatprep.subr.mxu0 0.0
    %953 = vmatpush1.msra.mxu0 0.0
    %954 = vmatprep.subr.mxu0 0.0
    %955 = vmatpush1.msra.mxu0 0.0
    %956 = vmatprep.subr.mxu0 0.0
    %957 = vmatpush1.msra.mxu0 0.0
    %958 = vmatprep.mubr.f32.mxu0 0.0
    %959 = vmatmul.mubr.f32.gmra.mrb[0].mxu0 %v593
    %v960 = vpop.f32.mrb[0].mxu0
    %v961 = vadd.f32 %v575, %v960
    %v962 = vpop.f32.mrb[0].mxu0
    %v963 = vadd.f32 %v579, %v962
    %964 = vmatprep.mubr.f32.mxu0 0.0
    %965 = vmatmul.mubr.f32.gmra.mrb[0].mxu0 %v596
    %v966 = vpop.f32.mrb[0].mxu0
    %v967 = vadd.f32 %v575, %v966
    %v968 = vpop.f32.mrb[0].mxu0
    %v969 = vadd.f32 %v579, %v968
    %970 = vmatprep.mubr.f32.mxu0 0.0
    %971 = vmatmul.mubr.f32.gmra.mrb[0].mxu0 %v599
    %v972 = vpop.f32.mrb[0].mxu0
    %v973 = vadd.f32 %v575, %v972
    %v974 = vpop.f32.mrb[0].mxu0
    %v975 = vadd.f32 %v579, %v974
    %976 = vmatprep.mubr.f32.mxu0 0.0
    %977 = vmatmul.mubr.f32.gmra.mrb[0].mxu0 %v602
    %v978 = vpop.f32.mrb[0].mxu0
    %v979 = vadd.f32 %v575, %v978
    %v980 = vpop.f32.mrb[0].mxu0
    %v981 = vadd.f32 %v579, %v980
    %982 = vmatprep.mubr.f32.mxu0 0.0
    %983 = vmatmul.mubr.f32.gmra.mrb[0].mxu0 %v605
    %v984 = vpop.f32.mrb[0].mxu0
    %v985 = vadd.f32 %v575, %v984
    %v986 = vpop.f32.mrb[0].mxu0
    %v987 = vadd.f32 %v579, %v986
    %988 = vmatprep.mubr.f32.mxu0 0.0
    %989 = vmatmul.mubr.f32.gmra.mrb[0].mxu0 %v608
    %v990 = vpop.f32.mrb[0].mxu0
    %v991 = vadd.f32 %v575, %v990
    %v992 = vpop.f32.mrb[0].mxu0
    %v993 = vadd.f32 %v579, %v992
    %994 = vmatprep.mubr.f32.mxu0 0.0
    %995 = vmatmul.mubr.f32.gmra.mrb[0].mxu0 %v611
    %v996 = vpop.f32.mrb[0].mxu0
    %v997 = vadd.f32 %v575, %v996
    %v998 = vpop.f32.mrb[0].mxu0
    %v999 = vadd.f32 %v579, %v998
    %1000 = vmatprep.mubr.f32.mxu0 0.0
    %1001 = vmatmul.mubr.f32.gmra.mrb[0].mxu0 %v614
    %v1002 = vpop.f32.mrb[0].mxu0
    %v1003 = vadd.f32 %v575, %v1002
    %v1004 = vpop.f32.mrb[0].mxu0
    %v1005 = vadd.f32 %v579, %v1004
    %1006 = vmatprep.mubr.f32.mxu0 0.0
    %1007 = vmatmul.mubr.f32.gmra.mrb[0].mxu0 %v617
    %v1008 = vpop.f32.mrb[0].mxu0
    %v1009 = vadd.f32 %v575, %v1008
    %v1010 = vpop.f32.mrb[0].mxu0
    %v1011 = vadd.f32 %v579, %v1010
    %1012 = vmatprep.mubr.f32.mxu0 0.0
    %1013 = vmatmul.mubr.f32.gmra.mrb[0].mxu0 %v620
    %v1014 = vpop.f32.mrb[0].mxu0
    %v1015 = vadd.f32 %v575, %v1014
    %v1016 = vpop.f32.mrb[0].mxu0
    %v1017 = vadd.f32 %v579, %v1016
    %1018 = vdwg.mxu0
    %1019 = vmatprep.subr.mxu0 0.0
    %1020 = vmatpush1.msra.mxu0 %v539
    %1021 = vmatprep.subr.mxu0 0.0
    %1022 = vmatpush1.msra.mxu0 %v546
    %1023 = vmatprep.subr.mxu0 0.0
    %1024 = vmatpush1.msra.mxu0 %v642
    %1025 = vmatprep.subr.mxu0 0.0
    %1026 = vmatpush1.msra.mxu0 0.0
    %1027 = vmatprep.subr.mxu0 0.0
    %1028 = vmatpush1.msra.mxu0 0.0
    %1029 = vmatprep.subr.mxu0 0.0
    %1030 = vmatpush1.msra.mxu0 0.0
    %1031 = vmatprep.subr.mxu0 0.0
    %1032 = vmatpush1.msra.mxu0 0.0
    %1033 = vmatprep.subr.mxu0 0.0
    %1034 = vmatpush1.msra.mxu0 0.0
    %1035 = vmatprep.subr.mxu0 0.0
    %1036 = vmatpush1.msra.mxu0 0.0
    %1037 = vmatprep.subr.mxu0 0.0
    %1038 = vmatpush1.msra.mxu0 0.0
    %1039 = vmatprep.subr.mxu0 0.0
    %1040 = vmatpush1.msra.mxu0 0.0
    %1041 = vmatprep.subr.mxu0 0.0
    %1042 = vmatpush1.msra.mxu0 0.0
    %1043 = vmatprep.subr.mxu0 0.0
    %1044 = vmatpush1.msra.mxu0 0.0
    %1045 = vmatprep.subr.mxu0 0.0
    %1046 = vmatpush1.msra.mxu0 0.0
    %1047 = vmatprep.subr.mxu0 0.0
    %1048 = vmatpush1.msra.mxu0 0.0
    %1049 = vmatprep.subr.mxu0 0.0
    %1050 = vmatpush1.msra.mxu0 0.0
    %1051 = vmatprep.subr.mxu0 0.0
    %1052 = vmatpush1.msra.mxu0 0.0
    %1053 = vmatprep.subr.mxu0 0.0
    %1054 = vmatpush1.msra.mxu0 0.0
    %1055 = vmatprep.subr.mxu0 0.0
    %1056 = vmatpush1.msra.mxu0 0.0
    %1057 = vmatprep.subr.mxu0 0.0
    %1058 = vmatpush1.msra.mxu0 0.0
    %1059 = vmatprep.subr.mxu0 0.0
    %1060 = vmatpush1.msra.mxu0 0.0
    %1061 = vmatprep.subr.mxu0 0.0
    %1062 = vmatpush1.msra.mxu0 0.0
    %1063 = vmatprep.subr.mxu0 0.0
    %1064 = vmatpush1.msra.mxu0 0.0
    %1065 = vmatprep.subr.mxu0 0.0
    %1066 = vmatpush1.msra.mxu0 0.0
    %1067 = vmatprep.subr.mxu0 0.0
    %1068 = vmatpush1.msra.mxu0 0.0
    %1069 = vmatprep.subr.mxu0 0.0
    %1070 = vmatpush1.msra.mxu0 0.0
    %1071 = vmatprep.subr.mxu0 0.0
    %1072 = vmatpush1.msra.mxu0 0.0
    %1073 = vmatprep.subr.mxu0 0.0
    %1074 = vmatpush1.msra.mxu0 0.0
    %1075 = vmatprep.subr.mxu0 0.0
    %1076 = vmatpush1.msra.mxu0 0.0
    %1077 = vmatprep.subr.mxu0 0.0
    %1078 = vmatpush1.msra.mxu0 0.0
    %1079 = vmatprep.subr.mxu0 0.0
    %1080 = vmatpush1.msra.mxu0 0.0
    %1081 = vmatprep.subr.mxu0 0.0
    %1082 = vmatpush1.msra.mxu0 0.0
    %1083 = vmatprep.mubr.f32.mxu0 0.0
    %1084 = vmatmul.mubr.f32.gmra.mrb[0].mxu0 %v593
    %v1085 = vpop.f32.mrb[0].mxu0
    %v1086 = vadd.f32 %v583, %v1085
    %v1087 = vpop.f32.mrb[0].mxu0
    %1088 = vmatprep.mubr.f32.mxu0 0.0
    %1089 = vmatmul.mubr.f32.gmra.mrb[0].mxu0 %v596
    %v1090 = vpop.f32.mrb[0].mxu0
    %v1091 = vadd.f32 %v583, %v1090
    %v1092 = vpop.f32.mrb[0].mxu0
    %1093 = vmatprep.mubr.f32.mxu0 0.0
    %1094 = vmatmul.mubr.f32.gmra.mrb[0].mxu0 %v599
    %v1095 = vpop.f32.mrb[0].mxu0
    %v1096 = vadd.f32 %v583, %v1095
    %v1097 = vpop.f32.mrb[0].mxu0
    %1098 = vmatprep.mubr.f32.mxu0 0.0
    %1099 = vmatmul.mubr.f32.gmra.mrb[0].mxu0 %v602
    %v1100 = vpop.f32.mrb[0].mxu0
    %v1101 = vadd.f32 %v583, %v1100
    %v1102 = vpop.f32.mrb[0].mxu0
    %1103 = vmatprep.mubr.f32.mxu0 0.0
    %1104 = vmatmul.mubr.f32.gmra.mrb[0].mxu0 %v605
    %v1105 = vpop.f32.mrb[0].mxu0
    %v1106 = vadd.f32 %v583, %v1105
    %v1107 = vpop.f32.mrb[0].mxu0
    %1108 = vmatprep.mubr.f32.mxu0 0.0
    %1109 = vmatmul.mubr.f32.gmra.mrb[0].mxu0 %v608
    %v1110 = vpop.f32.mrb[0].mxu0
    %v1111 = vadd.f32 %v583, %v1110
    %v1112 = vpop.f32.mrb[0].mxu0
    %1113 = vmatprep.mubr.f32.mxu0 0.0
    %1114 = vmatmul.mubr.f32.gmra.mrb[0].mxu0 %v611
    %v1115 = vpop.f32.mrb[0].mxu0
    %v1116 = vadd.f32 %v583, %v1115
    %v1117 = vpop.f32.mrb[0].mxu0
    %1118 = vmatprep.mubr.f32.mxu0 0.0
    %1119 = vmatmul.mubr.f32.gmra.mrb[0].mxu0 %v614
    %v1120 = vpop.f32.mrb[0].mxu0
    %v1121 = vadd.f32 %v583, %v1120
    %v1122 = vpop.f32.mrb[0].mxu0
    %1123 = vmatprep.mubr.f32.mxu0 0.0
    %1124 = vmatmul.mubr.f32.gmra.mrb[0].mxu0 %v617
    %v1125 = vpop.f32.mrb[0].mxu0
    %v1126 = vadd.f32 %v583, %v1125
    %v1127 = vpop.f32.mrb[0].mxu0
    %1128 = vmatprep.mubr.f32.mxu0 0.0
    %1129 = vmatmul.mubr.f32.gmra.mrb[0].mxu0 %v620
    %v1130 = vpop.f32.mrb[0].mxu0
    %v1131 = vadd.f32 %v583, %v1130
    %v1132 = vpop.f32.mrb[0].mxu0
    %1133 = vdwg.mxu0
    %v1134 = vxor.u32 %v711, 2147483648
    %v1135 = vxor.u32 %v713, 2147483648
    %v1136 = vxor.u32 %v836, 2147483648
    %v1137 = vxor.u32 %v838, 2147483648
    %v1138 = vxor.u32 %v961, 2147483648
    %v1139 = vxor.u32 %v963, 2147483648
    %v1140 = vxor.u32 %v1086, 2147483648
    %v1141 = vxor.u32 %v717, 2147483648
    %v1142 = vxor.u32 %v719, 2147483648
    %v1143 = vxor.u32 %v842, 2147483648
    %v1144 = vxor.u32 %v844, 2147483648
    %v1145 = vxor.u32 %v967, 2147483648
    %v1146 = vxor.u32 %v969, 2147483648
    %v1147 = vxor.u32 %v1091, 2147483648
    %v1148 = vxor.u32 %v723, 2147483648
    %v1149 = vxor.u32 %v725, 2147483648
    %v1150 = vxor.u32 %v848, 2147483648
    %v1151 = vxor.u32 %v850, 2147483648
    %v1152 = vxor.u32 %v973, 2147483648
    %v1153 = vxor.u32 %v975, 2147483648
    %v1154 = vxor.u32 %v1096, 2147483648
    %v1155 = vxor.u32 %v729, 2147483648
    %v1156 = vxor.u32 %v731, 2147483648
    %v1157 = vxor.u32 %v854, 2147483648
    %v1158 = vxor.u32 %v856, 2147483648
    %v1159 = vxor.u32 %v979, 2147483648
    %v1160 = vxor.u32 %v981, 2147483648
    %v1161 = vxor.u32 %v1101, 2147483648
    %v1162 = vxor.u32 %v735, 2147483648
    %v1163 = vxor.u32 %v737, 2147483648
    %v1164 = vxor.u32 %v860, 2147483648
    %v1165 = vxor.u32 %v862, 2147483648
    %v1166 = vxor.u32 %v985, 2147483648
    %v1167 = vxor.u32 %v987, 2147483648
    %v1168 = vxor.u32 %v1106, 2147483648
    %v1169 = vxor.u32 %v741, 2147483648
    %v1170 = vxor.u32 %v743, 2147483648
    %v1171 = vxor.u32 %v866, 2147483648
    %v1172 = vxor.u32 %v868, 2147483648
    %v1173 = vxor.u32 %v991, 2147483648
    %v1174 = vxor.u32 %v993, 2147483648
    %v1175 = vxor.u32 %v1111, 2147483648
    %v1176 = vxor.u32 %v747, 2147483648
    %v1177 = vxor.u32 %v749, 2147483648
    %v1178 = vxor.u32 %v872, 2147483648
    %v1179 = vxor.u32 %v874, 2147483648
    %v1180 = vxor.u32 %v997, 2147483648
    %v1181 = vxor.u32 %v999, 2147483648
    %v1182 = vxor.u32 %v1116, 2147483648
    %v1183 = vxor.u32 %v753, 2147483648
    %v1184 = vxor.u32 %v755, 2147483648
    %v1185 = vxor.u32 %v878, 2147483648
    %v1186 = vxor.u32 %v880, 2147483648
    %v1187 = vxor.u32 %v1003, 2147483648
    %v1188 = vxor.u32 %v1005, 2147483648
    %v1189 = vxor.u32 %v1121, 2147483648
    %v1190 = vxor.u32 %v759, 2147483648
    %v1191 = vxor.u32 %v761, 2147483648
    %v1192 = vxor.u32 %v884, 2147483648
    %v1193 = vxor.u32 %v886, 2147483648
    %v1194 = vxor.u32 %v1009, 2147483648
    %v1195 = vxor.u32 %v1011, 2147483648
    %v1196 = vxor.u32 %v1126, 2147483648
    %v1197 = vxor.u32 %v765, 2147483648
    %v1198 = vxor.u32 %v767, 2147483648
    %v1199 = vxor.u32 %v890, 2147483648
    %v1200 = vxor.u32 %v892, 2147483648
    %v1201 = vxor.u32 %v1015, 2147483648
    %v1202 = vxor.u32 %v1017, 2147483648
    %v1203 = vxor.u32 %v1131, 2147483648
    %v1204 = vmul.f32 %v1134, 1.442695
    %v1205 = vpow.pop %v1204
    %v1206 = vmul.f32 %v1135, 1.442695
    %v1207 = vpow.pop %v1206
    %v1208 = vmul.f32 %v1136, 1.442695
    %v1209 = vpow.pop %v1208
    %v1210 = vmul.f32 %v1137, 1.442695
    %v1211 = vpow.pop %v1210
    %v1212 = vmul.f32 %v1138, 1.442695
    %v1213 = vpow.pop %v1212
    %v1214 = vmul.f32 %v1139, 1.442695
    %v1215 = vpow.pop %v1214
    %v1216 = vmul.f32 %v1140, 1.442695
    %v1217 = vpow.pop %v1216
    %v1218 = vmul.f32 %v1141, 1.442695
    %v1219 = vpow.pop %v1218
    %v1220 = vmul.f32 %v1142, 1.442695
    %v1221 = vpow.pop %v1220
    %v1222 = vmul.f32 %v1143, 1.442695
    %v1223 = vpow.pop %v1222
    %v1224 = vmul.f32 %v1144, 1.442695
    %v1225 = vpow.pop %v1224
    %v1226 = vmul.f32 %v1145, 1.442695
    %v1227 = vpow.pop %v1226
    %v1228 = vmul.f32 %v1146, 1.442695
    %v1229 = vpow.pop %v1228
    %v1230 = vmul.f32 %v1147, 1.442695
    %v1231 = vpow.pop %v1230
    %v1232 = vmul.f32 %v1148, 1.442695
    %v1233 = vpow.pop %v1232
    %v1234 = vmul.f32 %v1149, 1.442695
    %v1235 = vpow.pop %v1234
    %v1236 = vmul.f32 %v1150, 1.442695
    %v1237 = vpow.pop %v1236
    %v1238 = vmul.f32 %v1151, 1.442695
    %v1239 = vpow.pop %v1238
    %v1240 = vmul.f32 %v1152, 1.442695
    %v1241 = vpow.pop %v1240
    %v1242 = vmul.f32 %v1153, 1.442695
    %v1243 = vpow.pop %v1242
    %v1244 = vmul.f32 %v1154, 1.442695
    %v1245 = vpow.pop %v1244
    %v1246 = vmul.f32 %v1155, 1.442695
    %v1247 = vpow.pop %v1246
    %v1248 = vmul.f32 %v1156, 1.442695
    %v1249 = vpow.pop %v1248
    %v1250 = vmul.f32 %v1157, 1.442695
    %v1251 = vpow.pop %v1250
    %v1252 = vmul.f32 %v1158, 1.442695
    %v1253 = vpow.pop %v1252
    %v1254 = vmul.f32 %v1159, 1.442695
    %v1255 = vpow.pop %v1254
    %v1256 = vmul.f32 %v1160, 1.442695
    %v1257 = vpow.pop %v1256
    %v1258 = vmul.f32 %v1161, 1.442695
    %v1259 = vpow.pop %v1258
    %v1260 = vmul.f32 %v1162, 1.442695
    %v1261 = vpow.pop %v1260
    %v1262 = vmul.f32 %v1163, 1.442695
    %v1263 = vpow.pop %v1262
    %v1264 = vmul.f32 %v1164, 1.442695
    %v1265 = vpow.pop %v1264
    %v1266 = vmul.f32 %v1165, 1.442695
    %v1267 = vpow.pop %v1266
    %v1268 = vmul.f32 %v1166, 1.442695
    %v1269 = vpow.pop %v1268
    %v1270 = vmul.f32 %v1167, 1.442695
    %v1271 = vpow.pop %v1270
    %v1272 = vmul.f32 %v1168, 1.442695
    %v1273 = vpow.pop %v1272
    %v1274 = vmul.f32 %v1169, 1.442695
    %v1275 = vpow.pop %v1274
    %v1276 = vmul.f32 %v1170, 1.442695
    %v1277 = vpow.pop %v1276
    %v1278 = vmul.f32 %v1171, 1.442695
    %v1279 = vpow.pop %v1278
    %v1280 = vmul.f32 %v1172, 1.442695
    %v1281 = vpow.pop %v1280
    %v1282 = vmul.f32 %v1173, 1.442695
    %v1283 = vpow.pop %v1282
    %v1284 = vmul.f32 %v1174, 1.442695
    %v1285 = vpow.pop %v1284
    %v1286 = vmul.f32 %v1175, 1.442695
    %v1287 = vpow.pop %v1286
    %v1288 = vmul.f32 %v1176, 1.442695
    %v1289 = vpow.pop %v1288
    %v1290 = vmul.f32 %v1177, 1.442695
    %v1291 = vpow.pop %v1290
    %v1292 = vmul.f32 %v1178, 1.442695
    %v1293 = vpow.pop %v1292
    %v1294 = vmul.f32 %v1179, 1.442695
    %v1295 = vpow.pop %v1294
    %v1296 = vmul.f32 %v1180, 1.442695
    %v1297 = vpow.pop %v1296
    %v1298 = vmul.f32 %v1181, 1.442695
    %v1299 = vpow.pop %v1298
    %v1300 = vmul.f32 %v1182, 1.442695
    %v1301 = vpow.pop %v1300
    %v1302 = vmul.f32 %v1183, 1.442695
    %v1303 = vpow.pop %v1302
    %v1304 = vmul.f32 %v1184, 1.442695
    %v1305 = vpow.pop %v1304
    %v1306 = vmul.f32 %v1185, 1.442695
    %v1307 = vpow.pop %v1306
    %v1308 = vmul.f32 %v1186, 1.442695
    %v1309 = vpow.pop %v1308
    %v1310 = vmul.f32 %v1187, 1.442695
    %v1311 = vpow.pop %v1310
    %v1312 = vmul.f32 %v1188, 1.442695
    %v1313 = vpow.pop %v1312
    %v1314 = vmul.f32 %v1189, 1.442695
    %v1315 = vpow.pop %v1314
    %v1316 = vmul.f32 %v1190, 1.442695
    %v1317 = vpow.pop %v1316
    %v1318 = vmul.f32 %v1191, 1.442695
    %v1319 = vpow.pop %v1318
    %v1320 = vmul.f32 %v1192, 1.442695
    %v1321 = vpow.pop %v1320
    %v1322 = vmul.f32 %v1193, 1.442695
    %v1323 = vpow.pop %v1322
    %v1324 = vmul.f32 %v1194, 1.442695
    %v1325 = vpow.pop %v1324
    %v1326 = vmul.f32 %v1195, 1.442695
    %v1327 = vpow.pop %v1326
    %v1328 = vmul.f32 %v1196, 1.442695
    %v1329 = vpow.pop %v1328
    %v1330 = vmul.f32 %v1197, 1.442695
    %v1331 = vpow.pop %v1330
    %v1332 = vmul.f32 %v1198, 1.442695
    %v1333 = vpow.pop %v1332
    %v1334 = vmul.f32 %v1199, 1.442695
    %v1335 = vpow.pop %v1334
    %v1336 = vmul.f32 %v1200, 1.442695
    %v1337 = vpow.pop %v1336
    %v1338 = vmul.f32 %v1201, 1.442695
    %v1339 = vpow.pop %v1338
    %v1340 = vmul.f32 %v1202, 1.442695
    %v1341 = vpow.pop %v1340
    %v1342 = vmul.f32 %v1203, 1.442695
    %v1343 = vpow.pop %v1342
    %v1344 = vadd.f32 %v1205, 1.0
    %v1345 = vadd.f32 %v1207, 1.0
    %v1346 = vadd.f32 %v1209, 1.0
    %v1347 = vadd.f32 %v1211, 1.0
    %v1348 = vadd.f32 %v1213, 1.0
    %v1349 = vadd.f32 %v1215, 1.0
    %v1350 = vadd.f32 %v1217, 1.0
    %v1351 = vadd.f32 %v1219, 1.0
    %v1352 = vadd.f32 %v1221, 1.0
    %v1353 = vadd.f32 %v1223, 1.0
    %v1354 = vadd.f32 %v1225, 1.0
    %v1355 = vadd.f32 %v1227, 1.0
    %v1356 = vadd.f32 %v1229, 1.0
    %v1357 = vadd.f32 %v1231, 1.0
    %v1358 = vadd.f32 %v1233, 1.0
    %v1359 = vadd.f32 %v1235, 1.0
    %v1360 = vadd.f32 %v1237, 1.0
    %v1361 = vadd.f32 %v1239, 1.0
    %v1362 = vadd.f32 %v1241, 1.0
    %v1363 = vadd.f32 %v1243, 1.0
    %v1364 = vadd.f32 %v1245, 1.0
    %v1365 = vadd.f32 %v1247, 1.0
    %v1366 = vadd.f32 %v1249, 1.0
    %v1367 = vadd.f32 %v1251, 1.0
    %v1368 = vadd.f32 %v1253, 1.0
    %v1369 = vadd.f32 %v1255, 1.0
    %v1370 = vadd.f32 %v1257, 1.0
    %v1371 = vadd.f32 %v1259, 1.0
    %v1372 = vadd.f32 %v1261, 1.0
    %v1373 = vadd.f32 %v1263, 1.0
    %v1374 = vadd.f32 %v1265, 1.0
    %v1375 = vadd.f32 %v1267, 1.0
    %v1376 = vadd.f32 %v1269, 1.0
    %v1377 = vadd.f32 %v1271, 1.0
    %v1378 = vadd.f32 %v1273, 1.0
    %v1379 = vadd.f32 %v1275, 1.0
    %v1380 = vadd.f32 %v1277, 1.0
    %v1381 = vadd.f32 %v1279, 1.0
    %v1382 = vadd.f32 %v1281, 1.0
    %v1383 = vadd.f32 %v1283, 1.0
    %v1384 = vadd.f32 %v1285, 1.0
    %v1385 = vadd.f32 %v1287, 1.0
    %v1386 = vadd.f32 %v1289, 1.0
    %v1387 = vadd.f32 %v1291, 1.0
    %v1388 = vadd.f32 %v1293, 1.0
    %v1389 = vadd.f32 %v1295, 1.0
    %v1390 = vadd.f32 %v1297, 1.0
    %v1391 = vadd.f32 %v1299, 1.0
    %v1392 = vadd.f32 %v1301, 1.0
    %v1393 = vadd.f32 %v1303, 1.0
    %v1394 = vadd.f32 %v1305, 1.0
    %v1395 = vadd.f32 %v1307, 1.0
    %v1396 = vadd.f32 %v1309, 1.0
    %v1397 = vadd.f32 %v1311, 1.0
    %v1398 = vadd.f32 %v1313, 1.0
    %v1399 = vadd.f32 %v1315, 1.0
    %v1400 = vadd.f32 %v1317, 1.0
    %v1401 = vadd.f32 %v1319, 1.0
    %v1402 = vadd.f32 %v1321, 1.0
    %v1403 = vadd.f32 %v1323, 1.0
    %v1404 = vadd.f32 %v1325, 1.0
    %v1405 = vadd.f32 %v1327, 1.0
    %v1406 = vadd.f32 %v1329, 1.0
    %v1407 = vadd.f32 %v1331, 1.0
    %v1408 = vadd.f32 %v1333, 1.0
    %v1409 = vadd.f32 %v1335, 1.0
    %v1410 = vadd.f32 %v1337, 1.0
    %v1411 = vadd.f32 %v1339, 1.0
    %v1412 = vadd.f32 %v1341, 1.0
    %v1413 = vadd.f32 %v1343, 1.0
    %v1414 = vrcp.pop %v1344
    %v1415 = vmul.f32 1.0, %v1414
    %v1416 = vrcp.pop %v1345
    %v1417 = vmul.f32 1.0, %v1416
    %v1418 = vrcp.pop %v1346
    %v1419 = vmul.f32 1.0, %v1418
    %v1420 = vrcp.pop %v1347
    %v1421 = vmul.f32 1.0, %v1420
    %v1422 = vrcp.pop %v1348
    %v1423 = vmul.f32 1.0, %v1422
    %v1424 = vrcp.pop %v1349
    %v1425 = vmul.f32 1.0, %v1424
    %v1426 = vrcp.pop %v1350
    %v1427 = vmul.f32 1.0, %v1426
    %v1428 = vrcp.pop %v1351
    %v1429 = vmul.f32 1.0, %v1428
    %v1430 = vrcp.pop %v1352
    %v1431 = vmul.f32 1.0, %v1430
    %v1432 = vrcp.pop %v1353
    %v1433 = vmul.f32 1.0, %v1432
    %v1434 = vrcp.pop %v1354
    %v1435 = vmul.f32 1.0, %v1434
    %v1436 = vrcp.pop %v1355
    %v1437 = vmul.f32 1.0, %v1436
    %v1438 = vrcp.pop %v1356
    %v1439 = vmul.f32 1.0, %v1438
    %v1440 = vrcp.pop %v1357
    %v1441 = vmul.f32 1.0, %v1440
    %v1442 = vrcp.pop %v1358
    %v1443 = vmul.f32 1.0, %v1442
    %v1444 = vrcp.pop %v1359
    %v1445 = vmul.f32 1.0, %v1444
    %v1446 = vrcp.pop %v1360
    %v1447 = vmul.f32 1.0, %v1446
    %v1448 = vrcp.pop %v1361
    %v1449 = vmul.f32 1.0, %v1448
    %v1450 = vrcp.pop %v1362
    %v1451 = vmul.f32 1.0, %v1450
    %v1452 = vrcp.pop %v1363
    %v1453 = vmul.f32 1.0, %v1452
    %v1454 = vrcp.pop %v1364
    %v1455 = vmul.f32 1.0, %v1454
    %v1456 = vrcp.pop %v1365
    %v1457 = vmul.f32 1.0, %v1456
    %v1458 = vrcp.pop %v1366
    %v1459 = vmul.f32 1.0, %v1458
    %v1460 = vrcp.pop %v1367
    %v1461 = vmul.f32 1.0, %v1460
    %v1462 = vrcp.pop %v1368
    %v1463 = vmul.f32 1.0, %v1462
    %v1464 = vrcp.pop %v1369
    %v1465 = vmul.f32 1.0, %v1464
    %v1466 = vrcp.pop %v1370
    %v1467 = vmul.f32 1.0, %v1466
    %v1468 = vrcp.pop %v1371
    %v1469 = vmul.f32 1.0, %v1468
    %v1470 = vrcp.pop %v1372
    %v1471 = vmul.f32 1.0, %v1470
    %v1472 = vrcp.pop %v1373
    %v1473 = vmul.f32 1.0, %v1472
    %v1474 = vrcp.pop %v1374
    %v1475 = vmul.f32 1.0, %v1474
    %v1476 = vrcp.pop %v1375
    %v1477 = vmul.f32 1.0, %v1476
    %v1478 = vrcp.pop %v1376
    %v1479 = vmul.f32 1.0, %v1478
    %v1480 = vrcp.pop %v1377
    %v1481 = vmul.f32 1.0, %v1480
    %v1482 = vrcp.pop %v1378
    %v1483 = vmul.f32 1.0, %v1482
    %v1484 = vrcp.pop %v1379
    %v1485 = vmul.f32 1.0, %v1484
    %v1486 = vrcp.pop %v1380
    %v1487 = vmul.f32 1.0, %v1486
    %v1488 = vrcp.pop %v1381
    %v1489 = vmul.f32 1.0, %v1488
    %v1490 = vrcp.pop %v1382
    %v1491 = vmul.f32 1.0, %v1490
    %v1492 = vrcp.pop %v1383
    %v1493 = vmul.f32 1.0, %v1492
    %v1494 = vrcp.pop %v1384
    %v1495 = vmul.f32 1.0, %v1494
    %v1496 = vrcp.pop %v1385
    %v1497 = vmul.f32 1.0, %v1496
    %v1498 = vrcp.pop %v1386
    %v1499 = vmul.f32 1.0, %v1498
    %v1500 = vrcp.pop %v1387
    %v1501 = vmul.f32 1.0, %v1500
    %v1502 = vrcp.pop %v1388
    %v1503 = vmul.f32 1.0, %v1502
    %v1504 = vrcp.pop %v1389
    %v1505 = vmul.f32 1.0, %v1504
    %v1506 = vrcp.pop %v1390
    %v1507 = vmul.f32 1.0, %v1506
    %v1508 = vrcp.pop %v1391
    %v1509 = vmul.f32 1.0, %v1508
    %v1510 = vrcp.pop %v1392
    %v1511 = vmul.f32 1.0, %v1510
    %v1512 = vrcp.pop %v1393
    %v1513 = vmul.f32 1.0, %v1512
    %v1514 = vrcp.pop %v1394
    %v1515 = vmul.f32 1.0, %v1514
    %v1516 = vrcp.pop %v1395
    %v1517 = vmul.f32 1.0, %v1516
    %v1518 = vrcp.pop %v1396
    %v1519 = vmul.f32 1.0, %v1518
    %v1520 = vrcp.pop %v1397
    %v1521 = vmul.f32 1.0, %v1520
    %v1522 = vrcp.pop %v1398
    %v1523 = vmul.f32 1.0, %v1522
    %v1524 = vrcp.pop %v1399
    %v1525 = vmul.f32 1.0, %v1524
    %v1526 = vrcp.pop %v1400
    %v1527 = vmul.f32 1.0, %v1526
    %v1528 = vrcp.pop %v1401
    %v1529 = vmul.f32 1.0, %v1528
    %v1530 = vrcp.pop %v1402
    %v1531 = vmul.f32 1.0, %v1530
    %v1532 = vrcp.pop %v1403
    %v1533 = vmul.f32 1.0, %v1532
    %v1534 = vrcp.pop %v1404
    %v1535 = vmul.f32 1.0, %v1534
    %v1536 = vrcp.pop %v1405
    %v1537 = vmul.f32 1.0, %v1536
    %v1538 = vrcp.pop %v1406
    %v1539 = vmul.f32 1.0, %v1538
    %v1540 = vrcp.pop %v1407
    %v1541 = vmul.f32 1.0, %v1540
    %v1542 = vrcp.pop %v1408
    %v1543 = vmul.f32 1.0, %v1542
    %v1544 = vrcp.pop %v1409
    %v1545 = vmul.f32 1.0, %v1544
    %v1546 = vrcp.pop %v1410
    %v1547 = vmul.f32 1.0, %v1546
    %v1548 = vrcp.pop %v1411
    %v1549 = vmul.f32 1.0, %v1548
    %v1550 = vrcp.pop %v1412
    %v1551 = vmul.f32 1.0, %v1550
    %v1552 = vrcp.pop %v1413
    %v1553 = vmul.f32 1.0, %v1552
    %v1554 = vadd.f32 %v1415, %v1429
    %v1555 = vadd.f32 %v1554, %v1443
    %v1556 = vadd.f32 %v1555, %v1457
    %v1557 = vadd.f32 %v1556, %v1471
    %v1558 = vadd.f32 %v1557, %v1485
    %v1559 = vadd.f32 %v1558, %v1499
    %v1560 = vadd.f32 %v1559, %v1513
    %v1561 = vadd.f32 %v1560, %v1527
    %v1562 = vadd.f32 %v1561, %v1541
    %v1563 = vadd.f32 %v1417, %v1431
    %v1564 = vadd.f32 %v1563, %v1445
    %v1565 = vadd.f32 %v1564, %v1459
    %v1566 = vadd.f32 %v1565, %v1473
    %v1567 = vadd.f32 %v1566, %v1487
    %v1568 = vadd.f32 %v1567, %v1501
    %v1569 = vadd.f32 %v1568, %v1515
    %v1570 = vadd.f32 %v1569, %v1529
    %v1571 = vadd.f32 %v1570, %v1543
    %v1572 = vadd.f32 %v1419, %v1433
    %v1573 = vadd.f32 %v1572, %v1447
    %v1574 = vadd.f32 %v1573, %v1461
    %v1575 = vadd.f32 %v1574, %v1475
    %v1576 = vadd.f32 %v1575, %v1489
    %v1577 = vadd.f32 %v1576, %v1503
    %v1578 = vadd.f32 %v1577, %v1517
    %v1579 = vadd.f32 %v1578, %v1531
    %v1580 = vadd.f32 %v1579, %v1545
    %v1581 = vadd.f32 %v1421, %v1435
    %v1582 = vadd.f32 %v1581, %v1449
    %v1583 = vadd.f32 %v1582, %v1463
    %v1584 = vadd.f32 %v1583, %v1477
    %v1585 = vadd.f32 %v1584, %v1491
    %v1586 = vadd.f32 %v1585, %v1505
    %v1587 = vadd.f32 %v1586, %v1519
    %v1588 = vadd.f32 %v1587, %v1533
    %v1589 = vadd.f32 %v1588, %v1547
    %v1590 = vadd.f32 %v1423, %v1437
    %v1591 = vadd.f32 %v1590, %v1451
    %v1592 = vadd.f32 %v1591, %v1465
    %v1593 = vadd.f32 %v1592, %v1479
    %v1594 = vadd.f32 %v1593, %v1493
    %v1595 = vadd.f32 %v1594, %v1507
    %v1596 = vadd.f32 %v1595, %v1521
    %v1597 = vadd.f32 %v1596, %v1535
    %v1598 = vadd.f32 %v1597, %v1549
    %v1599 = vadd.f32 %v1425, %v1439
    %v1600 = vadd.f32 %v1599, %v1453
    %v1601 = vadd.f32 %v1600, %v1467
    %v1602 = vadd.f32 %v1601, %v1481
    %v1603 = vadd.f32 %v1602, %v1495
    %v1604 = vadd.f32 %v1603, %v1509
    %v1605 = vadd.f32 %v1604, %v1523
    %v1606 = vadd.f32 %v1605, %v1537
    %v1607 = vadd.f32 %v1606, %v1551
    %v1608 = vsel %vm139, %v1427, 0.0
    %v1609 = vsel %vm139, %v1441, 0.0
    %v1610 = vadd.f32 %v1608, %v1609
    %v1611 = vsel %vm139, %v1455, 0.0
    %v1612 = vadd.f32 %v1610, %v1611
    %v1613 = vsel %vm139, %v1469, 0.0
    %v1614 = vadd.f32 %v1612, %v1613
    %v1615 = vsel %vm139, %v1483, 0.0
    %v1616 = vadd.f32 %v1614, %v1615
    %v1617 = vsel %vm139, %v1497, 0.0
    %v1618 = vadd.f32 %v1616, %v1617
    %v1619 = vsel %vm139, %v1511, 0.0
    %v1620 = vadd.f32 %v1618, %v1619
    %v1621 = vsel %vm139, %v1525, 0.0
    %v1622 = vadd.f32 %v1620, %v1621
    %v1623 = vsel %vm139, %v1539, 0.0
    %v1624 = vadd.f32 %v1622, %v1623
    %v1625 = vsel %vm139, %v1553, 0.0
    %v1626 = vadd.f32 %v1624, %v1625
    %v1627 = vmul.f32 %v1562, 0.1
    %v1628 = vmul.f32 %v1571, 0.1
    %v1629 = vmul.f32 %v1580, 0.1
    %v1630 = vmul.f32 %v1589, 0.1
    %v1631 = vmul.f32 %v1598, 0.1
    %v1632 = vmul.f32 %v1607, 0.1
    %v1633 = vmul.f32 %v1626, 0.1
    %1634 = vst [vmem:[#allocation2] sm:$0xff] %v1627
    %1635 = vst [vmem:[#allocation2 + $0x8] sm:$0xff] %v1628
    %1636 = vst [vmem:[#allocation2 + $0x10] sm:$0xff] %v1629
    %1637 = vst [vmem:[#allocation2 + $0x18] sm:$0xff] %v1630
    %1638 = vst [vmem:[#allocation2 + $0x20] sm:$0xff] %v1631
    %1639 = vst [vmem:[#allocation2 + $0x28] sm:$0xff] %v1632
    %1640 = vst.msk [vmem:[#allocation2 + $0x30] sm:$0xff] %vm139, %v1633
    // Predicated region
    $region26: #{tpu_custom_call.1} parent=1 // pred_check
      _
    $region27: #{tpu_custom_call.1} parent=1 // pred_check_branch
      %1642 = sbr.rel (0) target = $region29
    $region28: #{tpu_custom_call.1} parent=1 // pred_region
      %s1644 = ssub.s32 896, 896
      %1645 = vsyncadd [#allocation3], %s1644
      %s1647 = sshll.u32 [#allocation2], 4
      %s1648 = int_to_ptr.vmem [resolvable:$true] %s1647
      %1650 = dma.vmem_to_hbm [thread:$0]  %s1648, 896, %s6, [#allocation3]
    $region29: #{tpu_custom_call.1} parent=1 // pred_fallthru
      _
    // Predicated region
    $region30: #{tpu_custom_call.1} parent=1 // pred_check
      _
    $region31: #{tpu_custom_call.1} parent=1 // pred_check_branch
      %1652 = sbr.rel (0) target = $region33
    $region32: #{tpu_custom_call.1} parent=1 // pred_region
      %s1654 = ssub.s32 128, 128
      %1655 = vsyncadd [#allocation5], %s1654
      %s1657 = sshll.u32 [#allocation4], 4
      %s1658 = int_to_ptr.vmem [resolvable:$true] %s1657
      %1660 = dma.vmem_to_hbm [thread:$0]  %s1658, 128, %s7, [#allocation5]
    $region33: #{tpu_custom_call.1} parent=1 // pred_fallthru
      _
    // Predicated region
    $region34: #{tpu_custom_call.1} parent=1 // pred_check
      _
    $region35: #{tpu_custom_call.1} parent=1 // pred_check_branch
      %1662 = sbr.rel (0) target = $region37
    $region36: #{tpu_custom_call.1} parent=1 // pred_region
      %1663 = dma.done [#allocation3], 896
    $region37: #{tpu_custom_call.1} parent=1 // pred_fallthru
      _
    // Predicated region
    $region38: #{tpu_custom_call.1} parent=1 // pred_check
      _
    $region39: #{tpu_custom_call.1} parent=1 // pred_check_branch
      %1665 = sbr.rel (0) target = $region41
    $region40: #{tpu_custom_call.1} parent=1 // pred_region
      %1666 = dma.done [#allocation5], 128
    $region41: #{tpu_custom_call.1} parent=1 // pred_fallthru
      _
    %1667 = vsyncpa [#allocation3], 1
    %1668 = vsyncpa [#allocation5], 1

</llo_original>
